<compile_context>
chip_gen: v5e
topology: v5e:2x2
jax: 0.10.0
libtpu: 0.0.40
codegen_flags: <defaults>
</compile_context>

<pallas_src>
import jax
import jax.numpy as jnp
from jax.experimental import pallas as pl
from jax.experimental.pallas import tpu as pltpu


def _round_up(n, m):
    return ((n + m - 1) // m) * m


# ---------------------------------------------------------------------------
# Kernel 1: sequential 2-layer LSTM recurrence.
#   grid = (batch_blocks ["parallel"], time_blocks ["arbitrary"]); the inner time tile runs
#   as an in-kernel fori_loop.  h/c state lives in VMEM scratch that persists across time
#   blocks and is re-initialized whenever a new batch block starts (time index == 0).
# ---------------------------------------------------------------------------
def _lstm_recurrence_kernel(g0_ref,       # (TT, BB, 4H) f32   precomputed x@Wih0 + b0 (time-major)
                            whh0_ref,     # (H, 4H)      bf16  layer-0 recurrent weights
                            w1_ref,       # (2H, 4H)     bf16  stacked [Wih1; Whh1]
                            b1_ref,       # (1, 4H)      f32   layer-1 combined bias
                            h2_out_ref,   # (TT, BB, H)  f32   layer-1 hidden states (output)
                            h12_s,        # (BB, 2H)     f32   contiguous [h1 | h2] state
                            c1_s, c2_s):  # (BB, H)      f32   cell states
    TT = g0_ref.shape[0]
    BB = h12_s.shape[0]
    H = c1_s.shape[-1]

    # New batch block (time block index 0): reset state to zeros (h0 = c0 = 0 in the spec).
    @pl.when(pl.program_id(1) == 0)
    def _():
        h12_s[...] = jnp.zeros_like(h12_s)
        c1_s[...] = jnp.zeros_like(c1_s)
        c2_s[...] = jnp.zeros_like(c2_s)

    # Hoist weight loads and the bias broadcast out of the (unrolled) time loop.
    whh0 = whh0_ref[...]                                        # (H, 4H)  bf16
    w1 = w1_ref[...]                                            # (2H, 4H) bf16
    b1 = jnp.broadcast_to(b1_ref[...], (BB, 4 * H))             # (BB, 4H) f32

    def gate_update(gates, c_prev):
        # One full-width sigmoid over (BB, 4H); tanh only on the g-gate slice.
        sig = jax.nn.sigmoid(gates)
        i_g = sig[:, 0 * H:1 * H]
        f_g = sig[:, 1 * H:2 * H]
        o_g = sig[:, 3 * H:4 * H]
        g_g = jnp.tanh(gates[:, 2 * H:3 * H])
        c_new = f_g * c_prev + i_g * g_g
        h_new = o_g * jnp.tanh(c_new)
        return h_new, c_new

    def step(t, carry):
        # Layer 0: input projection was precomputed; only the recurrent dot remains.
        h1_prev = h12_s[:, 0:H].astype(jnp.bfloat16)
        gates0 = g0_ref[t] + jnp.dot(h1_prev, whh0,
                                     preferred_element_type=jnp.float32)
        h1_new, c1_new = gate_update(gates0, c1_s[...])
        c1_s[...] = c1_new
        h12_s[:, 0:H] = h1_new            # contiguous layout: no per-step concatenate

        # Layer 1: input + recurrent matmuls fused into one dot on the [h1_new | h2_prev] slab.
        gates1 = jnp.dot(h12_s[...].astype(jnp.bfloat16), w1,
                         preferred_element_type=jnp.float32) + b1
        h2_new, c2_new = gate_update(gates1, c2_s[...])
        c2_s[...] = c2_new
        h12_s[:, H:2 * H] = h2_new

        # Lane-dense per-step write into the VMEM-resident output tile.
        h2_out_ref[t] = h2_new
        return carry

    jax.lax.fori_loop(0, TT, step, 0, unroll=min(8, TT))


# ---------------------------------------------------------------------------
# Kernel 2: bulk epilogue  ReLU -> Linear -> softmax over a row tile.
#   Output dim is pre-padded to 128 lanes (zero weight cols, -1e30 bias) so the softmax
#   reductions and the store are lane-dense; padded logits exp to exactly 0.
# ---------------------------------------------------------------------------
def _fc_softmax_kernel(h_ref,     # (R, H)
                       wfc_ref,   # (H, Opad)
                       bfc_ref,   # (1, Opad)
                       out_ref):  # (R, Opad)
    relu = jnp.maximum(h_ref[...], 0.0)
    logits = jnp.dot(relu, wfc_ref[...], preferred_element_type=jnp.float32) + bfc_ref[...]
    logits = logits - jnp.max(logits, axis=-1, keepdims=True)
    e = jnp.exp(logits)
    denom = jnp.sum(e, axis=-1, keepdims=True)
    out_ref[...] = (e * pl.reciprocal(denom, approx=False)).astype(out_ref.dtype)


# ---------------------------------------------------------------------------
# Wrapper
# ---------------------------------------------------------------------------
def lstm_net_forward(x, params):
    """x: (B, T, D) float32.  Returns softmax probabilities of shape (B, T, O)."""
    B, T, D = x.shape
    H = params["whh0"].shape[0]
    O = params["wfc"].shape[1]
    x = x.astype(jnp.float32)

    BB = 8                               # batch block = one full f32 sublane group
    B_pad = _round_up(B, BB)
    TT = T if T <= 32 else 32            # time tile: caps VMEM, lets BlockSpec pipeline g0
    T_pad = _round_up(T, TT)

    # (1) Bulk layer-0 input projection (no sequential dependence): one large matmul,
    #     emitted time-major (T, B_pad, 4H).  Done in XLA by design.
    x_p = jnp.pad(x, ((0, B_pad - B), (0, 0), (0, 0)))
    g0 = jnp.einsum("btd,dg->tbg", x_p, params["wih0"]) + params["b0"][None]
    g0 = jnp.pad(g0, ((0, T_pad - T), (0, 0), (0, 0)))

    # (2) Sequential recurrence: batch-parallel / time-tiled grid, time loop inside the kernel.
    h2_tm = pl.pallas_call(
        _lstm_recurrence_kernel,
        out_shape=jax.ShapeDtypeStruct((T_pad, B_pad, H), jnp.float32),
        grid_spec=pltpu.PrefetchScalarGridSpec(
            num_scalar_prefetch=0,
            grid=(B_pad // BB, T_pad // TT),
            in_specs=[
                pl.BlockSpec((TT, BB, 4 * H), lambda b, t: (t, b, 0)),   # g0 time tile
                pl.BlockSpec((H, 4 * H), lambda b, t: (0, 0)),           # whh0 (bf16)
                pl.BlockSpec((2 * H, 4 * H), lambda b, t: (0, 0)),       # stacked layer-1 w (bf16)
                pl.BlockSpec((1, 4 * H), lambda b, t: (0, 0)),           # b1
            ],
            out_specs=pl.BlockSpec((TT, BB, H), lambda b, t: (t, b, 0)),
            scratch_shapes=[
                pltpu.VMEM((BB, 2 * H), jnp.float32),   # [h1 | h2] contiguous state
                pltpu.VMEM((BB, H), jnp.float32),       # c1
                pltpu.VMEM((BB, H), jnp.float32),       # c2
            ],
        ),
        compiler_params=pltpu.CompilerParams(
            dimension_semantics=("parallel", "arbitrary"),   # batch parallel, time sequential
        ),
    )(g0, params["whh0_bf"], params["w1_bf"], params["b1"])

    # (3) Bulk epilogue over row tiles of the flattened (T_pad*B_pad, H) slab.
    N = T_pad * B_pad
    ROWS_BLK = min(512, N)               # N is always a multiple of 8
    N_pad = _round_up(N, ROWS_BLK)
    h_flat = h2_tm.reshape(N, H)
    if N_pad != N:
        h_flat = jnp.pad(h_flat, ((0, N_pad - N), (0, 0)))
    O_pad = params["wfc_pad"].shape[1]

    probs_full = pl.pallas_call(
        _fc_softmax_kernel,
        out_shape=jax.ShapeDtypeStruct((N_pad, O_pad), jnp.float32),
        grid_spec=pltpu.PrefetchScalarGridSpec(
            num_scalar_prefetch=0,
            grid=(N_pad // ROWS_BLK,),
            in_specs=[
                pl.BlockSpec((ROWS_BLK, H), lambda i: (i, 0)),
                pl.BlockSpec((H, O_pad), lambda i: (0, 0)),
                pl.BlockSpec((1, O_pad), lambda i: (0, 0)),
            ],
            out_specs=pl.BlockSpec((ROWS_BLK, O_pad), lambda i: (i, 0)),
        ),
        compiler_params=pltpu.CompilerParams(
            dimension_semantics=("parallel",),
        ),
    )(h_flat, params["wfc_pad"], params["bfc_pad"])

    # Drop batch / time / output-lane padding and return batch_first (B, T, O).
    probs = probs_full[:N, :O].reshape(T_pad, B_pad, O)[:T, :B]
    return probs.transpose(1, 0, 2)


def init_params(key, input_dim, hidden_dim, output_dim):
    """Deterministic parameter init (uniform +-1/sqrt(H), like nn.LSTM / nn.Linear)."""
    H = hidden_dim
    k = 1.0 / jnp.sqrt(jnp.float32(H))
    keys = jax.random.split(key, 12)
    u = lambda kk, shape: jax.random.uniform(kk, shape, jnp.float32, -k, k)

    # PyTorch stores W_ih: (4H, in), W_hh: (4H, H); pre-transpose for row-major MXU dots.
    wih0 = u(keys[0], (4 * H, input_dim)).T                       # (D, 4H)
    whh0 = u(keys[1], (4 * H, H)).T                               # (H, 4H)
    b0 = (u(keys[2], (4 * H,)) + u(keys[3], (4 * H,))).reshape(1, 4 * H)
    wih1 = u(keys[4], (4 * H, H)).T                               # (H, 4H)
    whh1 = u(keys[5], (4 * H, H)).T                               # (H, 4H)
    b1 = (u(keys[6], (4 * H,)) + u(keys[7], (4 * H,))).reshape(1, 4 * H)
    wfc = u(keys[8], (output_dim, H)).T                           # (H, O)
    bfc = u(keys[9], (output_dim,)).reshape(1, output_dim)

    # One-time kernel-layout transforms:
    w1 = jnp.concatenate([wih1, whh1], axis=0)                    # (2H, 4H) stacked layer-1 w
    whh0_bf = whh0.astype(jnp.bfloat16)                           # bf16 copies for the MXU dots
    w1_bf = w1.astype(jnp.bfloat16)
    O_pad = _round_up(output_dim, 128)                            # lane-dense fc output
    wfc_pad = jnp.zeros((H, O_pad), jnp.float32).at[:, :output_dim].set(wfc)
    bfc_pad = jnp.full((1, O_pad), -1e30, jnp.float32).at[:, :output_dim].set(bfc)

    return dict(wih0=wih0, whh0=whh0, b0=b0,
                wih1=wih1, whh1=whh1, b1=b1,
                w1=w1, whh0_bf=whh0_bf, w1_bf=w1_bf,
                wfc=wfc, bfc=bfc, wfc_pad=wfc_pad, bfc_pad=bfc_pad)


def _reference_forward(x, params):
    """Pure-JAX f32 reference (lax.scan over timesteps) for correctness checking."""
    H = params["whh0"].shape[0]

    def cell(inp, h, c, w_ih, w_hh, b):
        gates = inp @ w_ih + h @ w_hh + b
        i_g = jax.nn.sigmoid(gates[:, 0 * H:1 * H])
        f_g = jax.nn.sigmoid(gates[:, 1 * H:2 * H])
        g_g = jnp.tanh(gates[:, 2 * H:3 * H])
        o_g = jax.nn.sigmoid(gates[:, 3 * H:4 * H])
        c_new = f_g * c + i_g * g_g
        return o_g * jnp.tanh(c_new), c_new

    B = x.shape[0]
    init = (jnp.zeros((B, H)),) * 4

    def step(carry, x_t):
        h1, c1, h2, c2 = carry
        h1, c1 = cell(x_t, h1, c1, params["wih0"], params["whh0"], params["b0"])
        h2, c2 = cell(h1, h2, c2, params["wih1"], params["whh1"], params["b1"])
        return (h1, c1, h2, c2), h2

    _, outs = jax.lax.scan(step, init, jnp.transpose(x, (1, 0, 2)))
    out = jnp.transpose(outs, (1, 0, 2))                       # (B, T, H)
    logits = jnp.maximum(out, 0.0) @ params["wfc"] + params["bfc"]
    return jax.nn.softmax(logits, axis=-1)


if __name__ == "__main__":
    # batch, seq, input_dim, hidden_dim, output_dim
    # (spec's hidden_dim=50; 32 is used here so 4H = 128 aligns gate slices to one lane tile)
    B, T, D, H, O = 2, 8, 16, 32, 4

    key = jax.random.PRNGKey(0)
    k_x, k_p = jax.random.split(key)
    x = jax.random.normal(k_x, (B, T, D), jnp.float32)
    params = init_params(k_p, D, H, O)

    forward = jax.jit(lstm_net_forward)
    out = jax.block_until_ready(forward(x, params))

    assert out.shape == (B, T, O), out.shape
    assert bool(jnp.all(jnp.isfinite(out)))

    # Tolerance reflects the bf16-operand recurrence dots (f32 accumulation); the pure-f32
    # reference keeps the spec semantics.
    ref = _reference_forward(x, params)
    assert bool(jnp.allclose(out, ref, atol=1e-2, rtol=1e-2)), \
        f"max err {float(jnp.max(jnp.abs(out - ref)))}"

    print("KERNEL_OK")
</pallas_src>

<mosaic_0001>
module attributes {stable_mosaic.version = 11 : i64} {
  func.func @_fc_softmax_kernel(%arg0: i32, %arg1: memref<64x32xf32, #tpu.memory_space<vmem>>, %arg2: memref<32x128xf32, #tpu.memory_space<vmem>>, %arg3: memref<1x128xf32, #tpu.memory_space<vmem>>, %arg4: memref<64x128xf32, #tpu.memory_space<vmem>>) attributes {dimension_semantics = [#tpu.dimension_semantics<parallel>], iteration_bounds = array<i64: 1>, scalar_prefetch = 0 : i64, scratch_operands = 0 : i64, tpu.core_type = #tpu.core_type<tc>, window_params = [{transform_indices = @transform_0, window_bounds = array<i64: 64, 32>}, {pipeline_mode = #tpu.pipeline_mode<synchronous>, transform_indices = @transform_1, window_bounds = array<i64: 32, 128>}, {pipeline_mode = #tpu.pipeline_mode<synchronous>, transform_indices = @transform_2, window_bounds = array<i64: 1, 128>}, {transform_indices = @transform_3, window_bounds = array<i64: 64, 128>}]} {
    %c0 = arith.constant 0 : index
    %c0_0 = arith.constant 0 : index
    %0 = vector.load %arg1[%c0, %c0_0] : memref<64x32xf32, #tpu.memory_space<vmem>>, vector<64x32xf32>
    %cst = arith.constant 0.000000e+00 : f32
    %1 = vector.broadcast %cst : f32 to vector<64x32xf32>
    %2 = arith.maximumf %0, %1 : vector<64x32xf32>
    %c0_1 = arith.constant 0 : index
    %c0_2 = arith.constant 0 : index
    %3 = vector.load %arg2[%c0_1, %c0_2] : memref<32x128xf32, #tpu.memory_space<vmem>>, vector<32x128xf32>
    %cst_3 = arith.constant dense<0.000000e+00> : vector<64x128xf32>
    %4 = tpu.matmul %2, %3, %cst_3 {dimension_numbers = #tpu.dot_dimension_numbers<[1], [0], [0], [1], [0, 0, 1, 1], [], []>} : vector<64x32xf32>, vector<32x128xf32>, vector<64x128xf32> -> vector<64x128xf32>
    %c0_4 = arith.constant 0 : index
    %c0_5 = arith.constant 0 : index
    %5 = vector.load %arg3[%c0_4, %c0_5] : memref<1x128xf32, #tpu.memory_space<vmem>>, vector<1x128xf32>
    %6 = vector.broadcast %5 : vector<1x128xf32> to vector<64x128xf32>
    %7 = arith.addf %4, %6 : vector<64x128xf32>
    %cst_6 = arith.constant dense<0xFF800000> : vector<64xf32>
    %8 = vector.multi_reduction <maximumf>, %7, %cst_6 [1] : vector<64x128xf32> to vector<64xf32>
    %9 = vector.shape_cast %8 : vector<64xf32> to vector<64x1xf32>
    %10 = vector.broadcast %9 : vector<64x1xf32> to vector<64x128xf32>
    %11 = arith.subf %7, %10 : vector<64x128xf32>
    %12 = math.exp %11 : vector<64x128xf32>
    %cst_7 = arith.constant dense<0.000000e+00> : vector<64xf32>
    %13 = vector.multi_reduction <add>, %12, %cst_7 [1] : vector<64x128xf32> to vector<64xf32>
    %14 = vector.shape_cast %13 : vector<64xf32> to vector<64x1xf32>
    %15 = tpu.reciprocal %14 : vector<64x1xf32> -> vector<64x1xf32>
    %16 = vector.broadcast %15 : vector<64x1xf32> to vector<64x128xf32>
    %17 = arith.mulf %12, %16 : vector<64x128xf32>
    %c0_8 = arith.constant 0 : index
    %c0_9 = arith.constant 0 : index
    %18 = vector.load %arg4[%c0_8, %c0_9] : memref<64x128xf32, #tpu.memory_space<vmem>>, vector<64x128xf32>
    tpu.vector_store %arg4[%c0_8, %c0_9], %17 {strides = array<i32>} : memref<64x128xf32, #tpu.memory_space<vmem>>, vector<64x128xf32>,
    return
  }
  func.func @transform_0(%arg0: i32) -> (i32, i32) {
    %c0_i32 = arith.constant 0 : i32
    %c0_i32_0 = arith.constant 0 : i32
    return %arg0, %c0_i32 : i32, i32
  }
  func.func @transform_1(%arg0: i32) -> (i32, i32) {
    %c0_i32 = arith.constant 0 : i32
    %c0_i32_0 = arith.constant 0 : i32
    %c0_i32_1 = arith.constant 0 : i32
    return %c0_i32, %c0_i32_0 : i32, i32
  }
  func.func @transform_2(%arg0: i32) -> (i32, i32) {
    %c0_i32 = arith.constant 0 : i32
    %c0_i32_0 = arith.constant 0 : i32
    %c0_i32_1 = arith.constant 0 : i32
    return %c0_i32, %c0_i32_0 : i32, i32
  }
  func.func @transform_3(%arg0: i32) -> (i32, i32) {
    %c0_i32 = arith.constant 0 : i32
    %c0_i32_0 = arith.constant 0 : i32
    return %arg0, %c0_i32 : i32, i32
  }
}

module attributes {stable_mosaic.version = 11 : i64} {
  func.func @_lstm_recurrence_kernel(%arg0: i32, %arg1: i32, %arg2: memref<8x8x128xf32, #tpu.memory_space<vmem>>, %arg3: memref<32x128xbf16, #tpu.memory_space<vmem>>, %arg4: memref<64x128xbf16, #tpu.memory_space<vmem>>, %arg5: memref<1x128xf32, #tpu.memory_space<vmem>>, %arg6: memref<8x8x32xf32, #tpu.memory_space<vmem>>, %arg7: memref<8x64xf32, #tpu.memory_space<vmem>>, %arg8: memref<8x32xf32, #tpu.memory_space<vmem>>, %arg9: memref<8x32xf32, #tpu.memory_space<vmem>>) attributes {dimension_semantics = [#tpu.dimension_semantics<parallel>, #tpu.dimension_semantics<arbitrary>], iteration_bounds = array<i64: 1, 1>, scalar_prefetch = 0 : i64, scratch_operands = 3 : i64, tpu.core_type = #tpu.core_type<tc>, window_params = [{transform_indices = @transform_0, window_bounds = array<i64: 8, 8, 128>}, {pipeline_mode = #tpu.pipeline_mode<synchronous>, transform_indices = @transform_1, window_bounds = array<i64: 32, 128>}, {pipeline_mode = #tpu.pipeline_mode<synchronous>, transform_indices = @transform_2, window_bounds = array<i64: 64, 128>}, {pipeline_mode = #tpu.pipeline_mode<synchronous>, transform_indices = @transform_3, window_bounds = array<i64: 1, 128>}, {transform_indices = @transform_4, window_bounds = array<i64: 8, 8, 32>}]} {
    %c0_i32 = arith.constant 0 : i32
    %0 = arith.cmpi eq, %arg1, %c0_i32 : i32
    %1 = arith.extui %0 : i1 to i32
    %c0_i32_0 = arith.constant 0 : i32
    %2 = arith.cmpi ne, %1, %c0_i32_0 : i32
    scf.if %2 {
      %cst_197 = arith.constant 0.000000e+00 : f32
      %416 = vector.broadcast %cst_197 : f32 to vector<8x64xf32>
      %c0_198 = arith.constant 0 : index
      %c0_199 = arith.constant 0 : index
      %417 = vector.load %arg7[%c0_198, %c0_199] : memref<8x64xf32, #tpu.memory_space<vmem>>, vector<8x64xf32>
      tpu.vector_store %arg7[%c0_198, %c0_199], %416 {strides = array<i32>} : memref<8x64xf32, #tpu.memory_space<vmem>>, vector<8x64xf32>,
      %cst_200 = arith.constant 0.000000e+00 : f32
      %418 = vector.broadcast %cst_200 : f32 to vector<8x32xf32>
      %c0_201 = arith.constant 0 : index
      %c0_202 = arith.constant 0 : index
      %419 = vector.load %arg8[%c0_201, %c0_202] : memref<8x32xf32, #tpu.memory_space<vmem>>, vector<8x32xf32>
      tpu.vector_store %arg8[%c0_201, %c0_202], %418 {strides = array<i32>} : memref<8x32xf32, #tpu.memory_space<vmem>>, vector<8x32xf32>,
      %cst_203 = arith.constant 0.000000e+00 : f32
      %420 = vector.broadcast %cst_203 : f32 to vector<8x32xf32>
      %c0_204 = arith.constant 0 : index
      %c0_205 = arith.constant 0 : index
      %421 = vector.load %arg9[%c0_204, %c0_205] : memref<8x32xf32, #tpu.memory_space<vmem>>, vector<8x32xf32>
      tpu.vector_store %arg9[%c0_204, %c0_205], %420 {strides = array<i32>} : memref<8x32xf32, #tpu.memory_space<vmem>>, vector<8x32xf32>,
    } else {
    }
    %c0 = arith.constant 0 : index
    %c0_1 = arith.constant 0 : index
    %3 = vector.load %arg3[%c0, %c0_1] : memref<32x128xbf16, #tpu.memory_space<vmem>>, vector<32x128xbf16>
    %c0_2 = arith.constant 0 : index
    %c0_3 = arith.constant 0 : index
    %4 = vector.load %arg4[%c0_2, %c0_3] : memref<64x128xbf16, #tpu.memory_space<vmem>>, vector<64x128xbf16>
    %c0_4 = arith.constant 0 : index
    %c0_5 = arith.constant 0 : index
    %5 = vector.load %arg5[%c0_4, %c0_5] : memref<1x128xf32, #tpu.memory_space<vmem>>, vector<1x128xf32>
    %6 = vector.shape_cast %5 : vector<1x128xf32> to vector<1x128xf32>
    %7 = vector.broadcast %6 : vector<1x128xf32> to vector<8x128xf32>
    %c0_i32_6 = arith.constant 0 : i32
    %c0_7 = arith.constant 0 : index
    %c0_8 = arith.constant 0 : index
    %8 = vector.load %arg7[%c0_7, %c0_8] : memref<8x64xf32, #tpu.memory_space<vmem>>, vector<8x32xf32>
    %9 = arith.truncf %8 : vector<8x32xf32> to vector<8x32xbf16>
    %10 = arith.index_cast %c0_i32_6 : i32 to index
    %c0_9 = arith.constant 0 : index
    %c0_10 = arith.constant 0 : index
    %11 = vector.load %arg2[%10, %c0_9, %c0_10] : memref<8x8x128xf32, #tpu.memory_space<vmem>>, vector<1x8x128xf32>
    %12 = vector.shape_cast %11 : vector<1x8x128xf32> to vector<8x128xf32>
    %cst = arith.constant dense<0.000000e+00> : vector<8x128xf32>
    %13 = tpu.matmul %9, %3, %cst {dimension_numbers = #tpu.dot_dimension_numbers<[1], [0], [0], [1], [0, 0, 1, 1], [], []>} : vector<8x32xbf16>, vector<32x128xbf16>, vector<8x128xf32> -> vector<8x128xf32>
    %14 = arith.addf %12, %13 : vector<8x128xf32>
    %c0_11 = arith.constant 0 : index
    %c0_12 = arith.constant 0 : index
    %15 = vector.load %arg8[%c0_11, %c0_12] : memref<8x32xf32, #tpu.memory_space<vmem>>, vector<8x32xf32>
    %16 = arith.negf %14 : vector<8x128xf32>
    %17 = math.exp %16 : vector<8x128xf32>
    %cst_13 = arith.constant 1.000000e+00 : f32
    %18 = vector.broadcast %cst_13 : f32 to vector<8x128xf32>
    %19 = arith.addf %18, %17 : vector<8x128xf32>
    %20 = arith.divf %18, %19 : vector<8x128xf32>
    %21 = vector.extract_strided_slice %20 {offsets = [0, 0], sizes = [8, 32], strides = [1, 1]} : vector<8x128xf32> to vector<8x32xf32>
    %22 = vector.extract_strided_slice %20 {offsets = [0, 32], sizes = [8, 32], strides = [1, 1]} : vector<8x128xf32> to vector<8x32xf32>
    %23 = vector.extract_strided_slice %20 {offsets = [0, 96], sizes = [8, 32], strides = [1, 1]} : vector<8x128xf32> to vector<8x32xf32>
    %24 = vector.extract_strided_slice %14 {offsets = [0, 64], sizes = [8, 32], strides = [1, 1]} : vector<8x128xf32> to vector<8x32xf32>
    %25 = math.tanh %24 : vector<8x32xf32>
    %26 = arith.mulf %22, %15 : vector<8x32xf32>
    %27 = arith.mulf %21, %25 : vector<8x32xf32>
    %28 = arith.addf %26, %27 : vector<8x32xf32>
    %29 = math.tanh %28 : vector<8x32xf32>
    %30 = arith.mulf %23, %29 : vector<8x32xf32>
    %c0_14 = arith.constant 0 : index
    %c0_15 = arith.constant 0 : index
    %31 = vector.load %arg8[%c0_14, %c0_15] : memref<8x32xf32, #tpu.memory_space<vmem>>, vector<8x32xf32>
    tpu.vector_store %arg8[%c0_14, %c0_15], %28 {strides = array<i32>} : memref<8x32xf32, #tpu.memory_space<vmem>>, vector<8x32xf32>,
    %c0_16 = arith.constant 0 : index
    %c0_17 = arith.constant 0 : index
    %32 = vector.load %arg7[%c0_16, %c0_17] : memref<8x64xf32, #tpu.memory_space<vmem>>, vector<8x32xf32>
    tpu.vector_store %arg7[%c0_16, %c0_17], %30 {strides = array<i32>} : memref<8x64xf32, #tpu.memory_space<vmem>>, vector<8x32xf32>,
    %c0_18 = arith.constant 0 : index
    %c0_19 = arith.constant 0 : index
    %33 = vector.load %arg7[%c0_18, %c0_19] : memref<8x64xf32, #tpu.memory_space<vmem>>, vector<8x64xf32>
    %34 = arith.truncf %33 : vector<8x64xf32> to vector<8x64xbf16>
    %cst_20 = arith.constant dense<0.000000e+00> : vector<8x128xf32>
    %35 = tpu.matmul %34, %4, %cst_20 {dimension_numbers = #tpu.dot_dimension_numbers<[1], [0], [0], [1], [0, 0, 1, 1], [], []>} : vector<8x64xbf16>, vector<64x128xbf16>, vector<8x128xf32> -> vector<8x128xf32>
    %36 = arith.addf %35, %7 : vector<8x128xf32>
    %c0_21 = arith.constant 0 : index
    %c0_22 = arith.constant 0 : index
    %37 = vector.load %arg9[%c0_21, %c0_22] : memref<8x32xf32, #tpu.memory_space<vmem>>, vector<8x32xf32>
    %38 = arith.negf %36 : vector<8x128xf32>
    %39 = math.exp %38 : vector<8x128xf32>
    %cst_23 = arith.constant 1.000000e+00 : f32
    %40 = vector.broadcast %cst_23 : f32 to vector<8x128xf32>
    %41 = arith.addf %40, %39 : vector<8x128xf32>
    %42 = arith.divf %40, %41 : vector<8x128xf32>
    %43 = vector.extract_strided_slice %42 {offsets = [0, 0], sizes = [8, 32], strides = [1, 1]} : vector<8x128xf32> to vector<8x32xf32>
    %44 = vector.extract_strided_slice %42 {offsets = [0, 32], sizes = [8, 32], strides = [1, 1]} : vector<8x128xf32> to vector<8x32xf32>
    %45 = vector.extract_strided_slice %42 {offsets = [0, 96], sizes = [8, 32], strides = [1, 1]} : vector<8x128xf32> to vector<8x32xf32>
    %46 = vector.extract_strided_slice %36 {offsets = [0, 64], sizes = [8, 32], strides = [1, 1]} : vector<8x128xf32> to vector<8x32xf32>
    %47 = math.tanh %46 : vector<8x32xf32>
    %48 = arith.mulf %44, %37 : vector<8x32xf32>
    %49 = arith.mulf %43, %47 : vector<8x32xf32>
    %50 = arith.addf %48, %49 : vector<8x32xf32>
    %51 = math.tanh %50 : vector<8x32xf32>
    %52 = arith.mulf %45, %51 : vector<8x32xf32>
    %c0_24 = arith.constant 0 : index
    %c0_25 = arith.constant 0 : index
    %53 = vector.load %arg9[%c0_24, %c0_25] : memref<8x32xf32, #tpu.memory_space<vmem>>, vector<8x32xf32>
    tpu.vector_store %arg9[%c0_24, %c0_25], %50 {strides = array<i32>} : memref<8x32xf32, #tpu.memory_space<vmem>>, vector<8x32xf32>,
    %c0_26 = arith.constant 0 : index
    %c32 = arith.constant 32 : index
    %54 = vector.load %arg7[%c0_26, %c32] : memref<8x64xf32, #tpu.memory_space<vmem>>, vector<8x32xf32>
    tpu.vector_store %arg7[%c0_26, %c32], %52 {strides = array<i32>} : memref<8x64xf32, #tpu.memory_space<vmem>>, vector<8x32xf32>,
    %55 = arith.index_cast %c0_i32_6 : i32 to index
    %c0_27 = arith.constant 0 : index
    %c0_28 = arith.constant 0 : index
    %56 = vector.load %arg6[%55, %c0_27, %c0_28] : memref<8x8x32xf32, #tpu.memory_space<vmem>>, vector<1x8x32xf32>
    %57 = vector.shape_cast %56 : vector<1x8x32xf32> to vector<8x32xf32>
    %58 = vector.shape_cast %52 : vector<8x32xf32> to vector<1x8x32xf32>
    tpu.vector_store %arg6[%55, %c0_27, %c0_28], %58 {strides = array<i32>} : memref<8x8x32xf32, #tpu.memory_space<vmem>>, vector<1x8x32xf32>,
    %c1_i32 = arith.constant 1 : i32
    %c0_29 = arith.constant 0 : index
    %c0_30 = arith.constant 0 : index
    %59 = vector.load %arg7[%c0_29, %c0_30] : memref<8x64xf32, #tpu.memory_space<vmem>>, vector<8x32xf32>
    %60 = arith.truncf %59 : vector<8x32xf32> to vector<8x32xbf16>
    %61 = arith.index_cast %c1_i32 : i32 to index
    %c0_31 = arith.constant 0 : index
    %c0_32 = arith.constant 0 : index
    %62 = vector.load %arg2[%61, %c0_31, %c0_32] : memref<8x8x128xf32, #tpu.memory_space<vmem>>, vector<1x8x128xf32>
    %63 = vector.shape_cast %62 : vector<1x8x128xf32> to vector<8x128xf32>
    %cst_33 = arith.constant dense<0.000000e+00> : vector<8x128xf32>
    %64 = tpu.matmul %60, %3, %cst_33 {dimension_numbers = #tpu.dot_dimension_numbers<[1], [0], [0], [1], [0, 0, 1, 1], [], []>} : vector<8x32xbf16>, vector<32x128xbf16>, vector<8x128xf32> -> vector<8x128xf32>
    %65 = arith.addf %63, %64 : vector<8x128xf32>
    %c0_34 = arith.constant 0 : index
    %c0_35 = arith.constant 0 : index
    %66 = vector.load %arg8[%c0_34, %c0_35] : memref<8x32xf32, #tpu.memory_space<vmem>>, vector<8x32xf32>
    %67 = arith.negf %65 : vector<8x128xf32>
    %68 = math.exp %67 : vector<8x128xf32>
    %cst_36 = arith.constant 1.000000e+00 : f32
    %69 = vector.broadcast %cst_36 : f32 to vector<8x128xf32>
    %70 = arith.addf %69, %68 : vector<8x128xf32>
    %71 = arith.divf %69, %70 : vector<8x128xf32>
    %72 = vector.extract_strided_slice %71 {offsets = [0, 0], sizes = [8, 32], strides = [1, 1]} : vector<8x128xf32> to vector<8x32xf32>
    %73 = vector.extract_strided_slice %71 {offsets = [0, 32], sizes = [8, 32], strides = [1, 1]} : vector<8x128xf32> to vector<8x32xf32>
    %74 = vector.extract_strided_slice %71 {offsets = [0, 96], sizes = [8, 32], strides = [1, 1]} : vector<8x128xf32> to vector<8x32xf32>
    %75 = vector.extract_strided_slice %65 {offsets = [0, 64], sizes = [8, 32], strides = [1, 1]} : vector<8x128xf32> to vector<8x32xf32>
    %76 = math.tanh %75 : vector<8x32xf32>
    %77 = arith.mulf %73, %66 : vector<8x32xf32>
    %78 = arith.mulf %72, %76 : vector<8x32xf32>
    %79 = arith.addf %77, %78 : vector<8x32xf32>
    %80 = math.tanh %79 : vector<8x32xf32>
    %81 = arith.mulf %74, %80 : vector<8x32xf32>
    %c0_37 = arith.constant 0 : index
    %c0_38 = arith.constant 0 : index
    %82 = vector.load %arg8[%c0_37, %c0_38] : memref<8x32xf32, #tpu.memory_space<vmem>>, vector<8x32xf32>
    tpu.vector_store %arg8[%c0_37, %c0_38], %79 {strides = array<i32>} : memref<8x32xf32, #tpu.memory_space<vmem>>, vector<8x32xf32>,
    %c0_39 = arith.constant 0 : index
    %c0_40 = arith.constant 0 : index
    %83 = vector.load %arg7[%c0_39, %c0_40] : memref<8x64xf32, #tpu.memory_space<vmem>>, vector<8x32xf32>
    tpu.vector_store %arg7[%c0_39, %c0_40], %81 {strides = array<i32>} : memref<8x64xf32, #tpu.memory_space<vmem>>, vector<8x32xf32>,
    %c0_41 = arith.constant 0 : index
    %c0_42 = arith.constant 0 : index
    %84 = vector.load %arg7[%c0_41, %c0_42] : memref<8x64xf32, #tpu.memory_space<vmem>>, vector<8x64xf32>
    %85 = arith.truncf %84 : vector<8x64xf32> to vector<8x64xbf16>
    %cst_43 = arith.constant dense<0.000000e+00> : vector<8x128xf32>
    %86 = tpu.matmul %85, %4, %cst_43 {dimension_numbers = #tpu.dot_dimension_numbers<[1], [0], [0], [1], [0, 0, 1, 1], [], []>} : vector<8x64xbf16>, vector<64x128xbf16>, vector<8x128xf32> -> vector<8x128xf32>
    %87 = arith.addf %86, %7 : vector<8x128xf32>
    %c0_44 = arith.constant 0 : index
    %c0_45 = arith.constant 0 : index
    %88 = vector.load %arg9[%c0_44, %c0_45] : memref<8x32xf32, #tpu.memory_space<vmem>>, vector<8x32xf32>
    %89 = arith.negf %87 : vector<8x128xf32>
    %90 = math.exp %89 : vector<8x128xf32>
    %cst_46 = arith.constant 1.000000e+00 : f32
    %91 = vector.broadcast %cst_46 : f32 to vector<8x128xf32>
    %92 = arith.addf %91, %90 : vector<8x128xf32>
    %93 = arith.divf %91, %92 : vector<8x128xf32>
    %94 = vector.extract_strided_slice %93 {offsets = [0, 0], sizes = [8, 32], strides = [1, 1]} : vector<8x128xf32> to vector<8x32xf32>
    %95 = vector.extract_strided_slice %93 {offsets = [0, 32], sizes = [8, 32], strides = [1, 1]} : vector<8x128xf32> to vector<8x32xf32>
    %96 = vector.extract_strided_slice %93 {offsets = [0, 96], sizes = [8, 32], strides = [1, 1]} : vector<8x128xf32> to vector<8x32xf32>
    %97 = vector.extract_strided_slice %87 {offsets = [0, 64], sizes = [8, 32], strides = [1, 1]} : vector<8x128xf32> to vector<8x32xf32>
    %98 = math.tanh %97 : vector<8x32xf32>
    %99 = arith.mulf %95, %88 : vector<8x32xf32>
    %100 = arith.mulf %94, %98 : vector<8x32xf32>
    %101 = arith.addf %99, %100 : vector<8x32xf32>
    %102 = math.tanh %101 : vector<8x32xf32>
    %103 = arith.mulf %96, %102 : vector<8x32xf32>
    %c0_47 = arith.constant 0 : index
    %c0_48 = arith.constant 0 : index
    %104 = vector.load %arg9[%c0_47, %c0_48] : memref<8x32xf32, #tpu.memory_space<vmem>>, vector<8x32xf32>
    tpu.vector_store %arg9[%c0_47, %c0_48], %101 {strides = array<i32>} : memref<8x32xf32, #tpu.memory_space<vmem>>, vector<8x32xf32>,
    %c0_49 = arith.constant 0 : index
    %c32_50 = arith.constant 32 : index
    %105 = vector.load %arg7[%c0_49, %c32_50] : memref<8x64xf32, #tpu.memory_space<vmem>>, vector<8x32xf32>
    tpu.vector_store %arg7[%c0_49, %c32_50], %103 {strides = array<i32>} : memref<8x64xf32, #tpu.memory_space<vmem>>, vector<8x32xf32>,
    %106 = arith.index_cast %c1_i32 : i32 to index
    %c0_51 = arith.constant 0 : index
    %c0_52 = arith.constant 0 : index
    %107 = vector.load %arg6[%106, %c0_51, %c0_52] : memref<8x8x32xf32, #tpu.memory_space<vmem>>, vector<1x8x32xf32>
    %108 = vector.shape_cast %107 : vector<1x8x32xf32> to vector<8x32xf32>
    %109 = vector.shape_cast %103 : vector<8x32xf32> to vector<1x8x32xf32>
    tpu.vector_store %arg6[%106, %c0_51, %c0_52], %109 {strides = array<i32>} : memref<8x8x32xf32, #tpu.memory_space<vmem>>, vector<1x8x32xf32>,
    %c2_i32 = arith.constant 2 : i32
    %c0_53 = arith.constant 0 : index
    %c0_54 = arith.constant 0 : index
    %110 = vector.load %arg7[%c0_53, %c0_54] : memref<8x64xf32, #tpu.memory_space<vmem>>, vector<8x32xf32>
    %111 = arith.truncf %110 : vector<8x32xf32> to vector<8x32xbf16>
    %112 = arith.index_cast %c2_i32 : i32 to index
    %c0_55 = arith.constant 0 : index
    %c0_56 = arith.constant 0 : index
    %113 = vector.load %arg2[%112, %c0_55, %c0_56] : memref<8x8x128xf32, #tpu.memory_space<vmem>>, vector<1x8x128xf32>
    %114 = vector.shape_cast %113 : vector<1x8x128xf32> to vector<8x128xf32>
    %cst_57 = arith.constant dense<0.000000e+00> : vector<8x128xf32>
    %115 = tpu.matmul %111, %3, %cst_57 {dimension_numbers = #tpu.dot_dimension_numbers<[1], [0], [0], [1], [0, 0, 1, 1], [], []>} : vector<8x32xbf16>, vector<32x128xbf16>, vector<8x128xf32> -> vector<8x128xf32>
    %116 = arith.addf %114, %115 : vector<8x128xf32>
    %c0_58 = arith.constant 0 : index
    %c0_59 = arith.constant 0 : index
    %117 = vector.load %arg8[%c0_58, %c0_59] : memref<8x32xf32, #tpu.memory_space<vmem>>, vector<8x32xf32>
    %118 = arith.negf %116 : vector<8x128xf32>
    %119 = math.exp %118 : vector<8x128xf32>
    %cst_60 = arith.constant 1.000000e+00 : f32
    %120 = vector.broadcast %cst_60 : f32 to vector<8x128xf32>
    %121 = arith.addf %120, %119 : vector<8x128xf32>
    %122 = arith.divf %120, %121 : vector<8x128xf32>
    %123 = vector.extract_strided_slice %122 {offsets = [0, 0], sizes = [8, 32], strides = [1, 1]} : vector<8x128xf32> to vector<8x32xf32>
    %124 = vector.extract_strided_slice %122 {offsets = [0, 32], sizes = [8, 32], strides = [1, 1]} : vector<8x128xf32> to vector<8x32xf32>
    %125 = vector.extract_strided_slice %122 {offsets = [0, 96], sizes = [8, 32], strides = [1, 1]} : vector<8x128xf32> to vector<8x32xf32>
    %126 = vector.extract_strided_slice %116 {offsets = [0, 64], sizes = [8, 32], strides = [1, 1]} : vector<8x128xf32> to vector<8x32xf32>
    %127 = math.tanh %126 : vector<8x32xf32>
    %128 = arith.mulf %124, %117 : vector<8x32xf32>
    %129 = arith.mulf %123, %127 : vector<8x32xf32>
    %130 = arith.addf %128, %129 : vector<8x32xf32>
    %131 = math.tanh %130 : vector<8x32xf32>
    %132 = arith.mulf %125, %131 : vector<8x32xf32>
    %c0_61 = arith.constant 0 : index
    %c0_62 = arith.constant 0 : index
    %133 = vector.load %arg8[%c0_61, %c0_62] : memref<8x32xf32, #tpu.memory_space<vmem>>, vector<8x32xf32>
    tpu.vector_store %arg8[%c0_61, %c0_62], %130 {strides = array<i32>} : memref<8x32xf32, #tpu.memory_space<vmem>>, vector<8x32xf32>,
    %c0_63 = arith.constant 0 : index
    %c0_64 = arith.constant 0 : index
    %134 = vector.load %arg7[%c0_63, %c0_64] : memref<8x64xf32, #tpu.memory_space<vmem>>, vector<8x32xf32>
    tpu.vector_store %arg7[%c0_63, %c0_64], %132 {strides = array<i32>} : memref<8x64xf32, #tpu.memory_space<vmem>>, vector<8x32xf32>,
    %c0_65 = arith.constant 0 : index
    %c0_66 = arith.constant 0 : index
    %135 = vector.load %arg7[%c0_65, %c0_66] : memref<8x64xf32, #tpu.memory_space<vmem>>, vector<8x64xf32>
    %136 = arith.truncf %135 : vector<8x64xf32> to vector<8x64xbf16>
    %cst_67 = arith.constant dense<0.000000e+00> : vector<8x128xf32>
    %137 = tpu.matmul %136, %4, %cst_67 {dimension_numbers = #tpu.dot_dimension_numbers<[1], [0], [0], [1], [0, 0, 1, 1], [], []>} : vector<8x64xbf16>, vector<64x128xbf16>, vector<8x128xf32> -> vector<8x128xf32>
    %138 = arith.addf %137, %7 : vector<8x128xf32>
    %c0_68 = arith.constant 0 : index
    %c0_69 = arith.constant 0 : index
    %139 = vector.load %arg9[%c0_68, %c0_69] : memref<8x32xf32, #tpu.memory_space<vmem>>, vector<8x32xf32>
    %140 = arith.negf %138 : vector<8x128xf32>
    %141 = math.exp %140 : vector<8x128xf32>
    %cst_70 = arith.constant 1.000000e+00 : f32
    %142 = vector.broadcast %cst_70 : f32 to vector<8x128xf32>
    %143 = arith.addf %142, %141 : vector<8x128xf32>
    %144 = arith.divf %142, %143 : vector<8x128xf32>
    %145 = vector.extract_strided_slice %144 {offsets = [0, 0], sizes = [8, 32], strides = [1, 1]} : vector<8x128xf32> to vector<8x32xf32>
    %146 = vector.extract_strided_slice %144 {offsets = [0, 32], sizes = [8, 32], strides = [1, 1]} : vector<8x128xf32> to vector<8x32xf32>
    %147 = vector.extract_strided_slice %144 {offsets = [0, 96], sizes = [8, 32], strides = [1, 1]} : vector<8x128xf32> to vector<8x32xf32>
    %148 = vector.extract_strided_slice %138 {offsets = [0, 64], sizes = [8, 32], strides = [1, 1]} : vector<8x128xf32> to vector<8x32xf32>
    %149 = math.tanh %148 : vector<8x32xf32>
    %150 = arith.mulf %146, %139 : vector<8x32xf32>
    %151 = arith.mulf %145, %149 : vector<8x32xf32>
    %152 = arith.addf %150, %151 : vector<8x32xf32>
    %153 = math.tanh %152 : vector<8x32xf32>
    %154 = arith.mulf %147, %153 : vector<8x32xf32>
    %c0_71 = arith.constant 0 : index
    %c0_72 = arith.constant 0 : index
    %155 = vector.load %arg9[%c0_71, %c0_72] : memref<8x32xf32, #tpu.memory_space<vmem>>, vector<8x32xf32>
    tpu.vector_store %arg9[%c0_71, %c0_72], %152 {strides = array<i32>} : memref<8x32xf32, #tpu.memory_space<vmem>>, vector<8x32xf32>,
    %c0_73 = arith.constant 0 : index
    %c32_74 = arith.constant 32 : index
    %156 = vector.load %arg7[%c0_73, %c32_74] : memref<8x64xf32, #tpu.memory_space<vmem>>, vector<8x32xf32>
    tpu.vector_store %arg7[%c0_73, %c32_74], %154 {strides = array<i32>} : memref<8x64xf32, #tpu.memory_space<vmem>>, vector<8x32xf32>,
    %157 = arith.index_cast %c2_i32 : i32 to index
    %c0_75 = arith.constant 0 : index
    %c0_76 = arith.constant 0 : index
    %158 = vector.load %arg6[%157, %c0_75, %c0_76] : memref<8x8x32xf32, #tpu.memory_space<vmem>>, vector<1x8x32xf32>
    %159 = vector.shape_cast %158 : vector<1x8x32xf32> to vector<8x32xf32>
    %160 = vector.shape_cast %154 : vector<8x32xf32> to vector<1x8x32xf32>
    tpu.vector_store %arg6[%157, %c0_75, %c0_76], %160 {strides = array<i32>} : memref<8x8x32xf32, #tpu.memory_space<vmem>>, vector<1x8x32xf32>,
    %c3_i32 = arith.constant 3 : i32
    %c0_77 = arith.constant 0 : index
    %c0_78 = arith.constant 0 : index
    %161 = vector.load %arg7[%c0_77, %c0_78] : memref<8x64xf32, #tpu.memory_space<vmem>>, vector<8x32xf32>
    %162 = arith.truncf %161 : vector<8x32xf32> to vector<8x32xbf16>
    %163 = arith.index_cast %c3_i32 : i32 to index
    %c0_79 = arith.constant 0 : index
    %c0_80 = arith.constant 0 : index
    %164 = vector.load %arg2[%163, %c0_79, %c0_80] : memref<8x8x128xf32, #tpu.memory_space<vmem>>, vector<1x8x128xf32>
    %165 = vector.shape_cast %164 : vector<1x8x128xf32> to vector<8x128xf32>
    %cst_81 = arith.constant dense<0.000000e+00> : vector<8x128xf32>
    %166 = tpu.matmul %162, %3, %cst_81 {dimension_numbers = #tpu.dot_dimension_numbers<[1], [0], [0], [1], [0, 0, 1, 1], [], []>} : vector<8x32xbf16>, vector<32x128xbf16>, vector<8x128xf32> -> vector<8x128xf32>
    %167 = arith.addf %165, %166 : vector<8x128xf32>
    %c0_82 = arith.constant 0 : index
    %c0_83 = arith.constant 0 : index
    %168 = vector.load %arg8[%c0_82, %c0_83] : memref<8x32xf32, #tpu.memory_space<vmem>>, vector<8x32xf32>
    %169 = arith.negf %167 : vector<8x128xf32>
    %170 = math.exp %169 : vector<8x128xf32>
    %cst_84 = arith.constant 1.000000e+00 : f32
    %171 = vector.broadcast %cst_84 : f32 to vector<8x128xf32>
    %172 = arith.addf %171, %170 : vector<8x128xf32>
    %173 = arith.divf %171, %172 : vector<8x128xf32>
    %174 = vector.extract_strided_slice %173 {offsets = [0, 0], sizes = [8, 32], strides = [1, 1]} : vector<8x128xf32> to vector<8x32xf32>
    %175 = vector.extract_strided_slice %173 {offsets = [0, 32], sizes = [8, 32], strides = [1, 1]} : vector<8x128xf32> to vector<8x32xf32>
    %176 = vector.extract_strided_slice %173 {offsets = [0, 96], sizes = [8, 32], strides = [1, 1]} : vector<8x128xf32> to vector<8x32xf32>
    %177 = vector.extract_strided_slice %167 {offsets = [0, 64], sizes = [8, 32], strides = [1, 1]} : vector<8x128xf32> to vector<8x32xf32>
    %178 = math.tanh %177 : vector<8x32xf32>
    %179 = arith.mulf %175, %168 : vector<8x32xf32>
    %180 = arith.mulf %174, %178 : vector<8x32xf32>
    %181 = arith.addf %179, %180 : vector<8x32xf32>
    %182 = math.tanh %181 : vector<8x32xf32>
    %183 = arith.mulf %176, %182 : vector<8x32xf32>
    %c0_85 = arith.constant 0 : index
    %c0_86 = arith.constant 0 : index
    %184 = vector.load %arg8[%c0_85, %c0_86] : memref<8x32xf32, #tpu.memory_space<vmem>>, vector<8x32xf32>
    tpu.vector_store %arg8[%c0_85, %c0_86], %181 {strides = array<i32>} : memref<8x32xf32, #tpu.memory_space<vmem>>, vector<8x32xf32>,
    %c0_87 = arith.constant 0 : index
    %c0_88 = arith.constant 0 : index
    %185 = vector.load %arg7[%c0_87, %c0_88] : memref<8x64xf32, #tpu.memory_space<vmem>>, vector<8x32xf32>
    tpu.vector_store %arg7[%c0_87, %c0_88], %183 {strides = array<i32>} : memref<8x64xf32, #tpu.memory_space<vmem>>, vector<8x32xf32>,
    %c0_89 = arith.constant 0 : index
    %c0_90 = arith.constant 0 : index
    %186 = vector.load %arg7[%c0_89, %c0_90] : memref<8x64xf32, #tpu.memory_space<vmem>>, vector<8x64xf32>
    %187 = arith.truncf %186 : vector<8x64xf32> to vector<8x64xbf16>
    %cst_91 = arith.constant dense<0.000000e+00> : vector<8x128xf32>
    %188 = tpu.matmul %187, %4, %cst_91 {dimension_numbers = #tpu.dot_dimension_numbers<[1], [0], [0], [1], [0, 0, 1, 1], [], []>} : vector<8x64xbf16>, vector<64x128xbf16>, vector<8x128xf32> -> vector<8x128xf32>
    %189 = arith.addf %188, %7 : vector<8x128xf32>
    %c0_92 = arith.constant 0 : index
    %c0_93 = arith.constant 0 : index
    %190 = vector.load %arg9[%c0_92, %c0_93] : memref<8x32xf32, #tpu.memory_space<vmem>>, vector<8x32xf32>
    %191 = arith.negf %189 : vector<8x128xf32>
    %192 = math.exp %191 : vector<8x128xf32>
    %cst_94 = arith.constant 1.000000e+00 : f32
    %193 = vector.broadcast %cst_94 : f32 to vector<8x128xf32>
    %194 = arith.addf %193, %192 : vector<8x128xf32>
    %195 = arith.divf %193, %194 : vector<8x128xf32>
    %196 = vector.extract_strided_slice %195 {offsets = [0, 0], sizes = [8, 32], strides = [1, 1]} : vector<8x128xf32> to vector<8x32xf32>
    %197 = vector.extract_strided_slice %195 {offsets = [0, 32], sizes = [8, 32], strides = [1, 1]} : vector<8x128xf32> to vector<8x32xf32>
    %198 = vector.extract_strided_slice %195 {offsets = [0, 96], sizes = [8, 32], strides = [1, 1]} : vector<8x128xf32> to vector<8x32xf32>
    %199 = vector.extract_strided_slice %189 {offsets = [0, 64], sizes = [8, 32], strides = [1, 1]} : vector<8x128xf32> to vector<8x32xf32>
    %200 = math.tanh %199 : vector<8x32xf32>
    %201 = arith.mulf %197, %190 : vector<8x32xf32>
    %202 = arith.mulf %196, %200 : vector<8x32xf32>
    %203 = arith.addf %201, %202 : vector<8x32xf32>
    %204 = math.tanh %203 : vector<8x32xf32>
    %205 = arith.mulf %198, %204 : vector<8x32xf32>
    %c0_95 = arith.constant 0 : index
    %c0_96 = arith.constant 0 : index
    %206 = vector.load %arg9[%c0_95, %c0_96] : memref<8x32xf32, #tpu.memory_space<vmem>>, vector<8x32xf32>
    tpu.vector_store %arg9[%c0_95, %c0_96], %203 {strides = array<i32>} : memref<8x32xf32, #tpu.memory_space<vmem>>, vector<8x32xf32>,
    %c0_97 = arith.constant 0 : index
    %c32_98 = arith.constant 32 : index
    %207 = vector.load %arg7[%c0_97, %c32_98] : memref<8x64xf32, #tpu.memory_space<vmem>>, vector<8x32xf32>
    tpu.vector_store %arg7[%c0_97, %c32_98], %205 {strides = array<i32>} : memref<8x64xf32, #tpu.memory_space<vmem>>, vector<8x32xf32>,
    %208 = arith.index_cast %c3_i32 : i32 to index
    %c0_99 = arith.constant 0 : index
    %c0_100 = arith.constant 0 : index
    %209 = vector.load %arg6[%208, %c0_99, %c0_100] : memref<8x8x32xf32, #tpu.memory_space<vmem>>, vector<1x8x32xf32>
    %210 = vector.shape_cast %209 : vector<1x8x32xf32> to vector<8x32xf32>
    %211 = vector.shape_cast %205 : vector<8x32xf32> to vector<1x8x32xf32>
    tpu.vector_store %arg6[%208, %c0_99, %c0_100], %211 {strides = array<i32>} : memref<8x8x32xf32, #tpu.memory_space<vmem>>, vector<1x8x32xf32>,
    %c4_i32 = arith.constant 4 : i32
    %c0_101 = arith.constant 0 : index
    %c0_102 = arith.constant 0 : index
    %212 = vector.load %arg7[%c0_101, %c0_102] : memref<8x64xf32, #tpu.memory_space<vmem>>, vector<8x32xf32>
    %213 = arith.truncf %212 : vector<8x32xf32> to vector<8x32xbf16>
    %214 = arith.index_cast %c4_i32 : i32 to index
    %c0_103 = arith.constant 0 : index
    %c0_104 = arith.constant 0 : index
    %215 = vector.load %arg2[%214, %c0_103, %c0_104] : memref<8x8x128xf32, #tpu.memory_space<vmem>>, vector<1x8x128xf32>
    %216 = vector.shape_cast %215 : vector<1x8x128xf32> to vector<8x128xf32>
    %cst_105 = arith.constant dense<0.000000e+00> : vector<8x128xf32>
    %217 = tpu.matmul %213, %3, %cst_105 {dimension_numbers = #tpu.dot_dimension_numbers<[1], [0], [0], [1], [0, 0, 1, 1], [], []>} : vector<8x32xbf16>, vector<32x128xbf16>, vector<8x128xf32> -> vector<8x128xf32>
    %218 = arith.addf %216, %217 : vector<8x128xf32>
    %c0_106 = arith.constant 0 : index
    %c0_107 = arith.constant 0 : index
    %219 = vector.load %arg8[%c0_106, %c0_107] : memref<8x32xf32, #tpu.memory_space<vmem>>, vector<8x32xf32>
    %220 = arith.negf %218 : vector<8x128xf32>
    %221 = math.exp %220 : vector<8x128xf32>
    %cst_108 = arith.constant 1.000000e+00 : f32
    %222 = vector.broadcast %cst_108 : f32 to vector<8x128xf32>
    %223 = arith.addf %222, %221 : vector<8x128xf32>
    %224 = arith.divf %222, %223 : vector<8x128xf32>
    %225 = vector.extract_strided_slice %224 {offsets = [0, 0], sizes = [8, 32], strides = [1, 1]} : vector<8x128xf32> to vector<8x32xf32>
    %226 = vector.extract_strided_slice %224 {offsets = [0, 32], sizes = [8, 32], strides = [1, 1]} : vector<8x128xf32> to vector<8x32xf32>
    %227 = vector.extract_strided_slice %224 {offsets = [0, 96], sizes = [8, 32], strides = [1, 1]} : vector<8x128xf32> to vector<8x32xf32>
    %228 = vector.extract_strided_slice %218 {offsets = [0, 64], sizes = [8, 32], strides = [1, 1]} : vector<8x128xf32> to vector<8x32xf32>
    %229 = math.tanh %228 : vector<8x32xf32>
    %230 = arith.mulf %226, %219 : vector<8x32xf32>
    %231 = arith.mulf %225, %229 : vector<8x32xf32>
    %232 = arith.addf %230, %231 : vector<8x32xf32>
    %233 = math.tanh %232 : vector<8x32xf32>
    %234 = arith.mulf %227, %233 : vector<8x32xf32>
    %c0_109 = arith.constant 0 : index
    %c0_110 = arith.constant 0 : index
    %235 = vector.load %arg8[%c0_109, %c0_110] : memref<8x32xf32, #tpu.memory_space<vmem>>, vector<8x32xf32>
    tpu.vector_store %arg8[%c0_109, %c0_110], %232 {strides = array<i32>} : memref<8x32xf32, #tpu.memory_space<vmem>>, vector<8x32xf32>,
    %c0_111 = arith.constant 0 : index
    %c0_112 = arith.constant 0 : index
    %236 = vector.load %arg7[%c0_111, %c0_112] : memref<8x64xf32, #tpu.memory_space<vmem>>, vector<8x32xf32>
    tpu.vector_store %arg7[%c0_111, %c0_112], %234 {strides = array<i32>} : memref<8x64xf32, #tpu.memory_space<vmem>>, vector<8x32xf32>,
    %c0_113 = arith.constant 0 : index
    %c0_114 = arith.constant 0 : index
    %237 = vector.load %arg7[%c0_113, %c0_114] : memref<8x64xf32, #tpu.memory_space<vmem>>, vector<8x64xf32>
    %238 = arith.truncf %237 : vector<8x64xf32> to vector<8x64xbf16>
    %cst_115 = arith.constant dense<0.000000e+00> : vector<8x128xf32>
    %239 = tpu.matmul %238, %4, %cst_115 {dimension_numbers = #tpu.dot_dimension_numbers<[1], [0], [0], [1], [0, 0, 1, 1], [], []>} : vector<8x64xbf16>, vector<64x128xbf16>, vector<8x128xf32> -> vector<8x128xf32>
    %240 = arith.addf %239, %7 : vector<8x128xf32>
    %c0_116 = arith.constant 0 : index
    %c0_117 = arith.constant 0 : index
    %241 = vector.load %arg9[%c0_116, %c0_117] : memref<8x32xf32, #tpu.memory_space<vmem>>, vector<8x32xf32>
    %242 = arith.negf %240 : vector<8x128xf32>
    %243 = math.exp %242 : vector<8x128xf32>
    %cst_118 = arith.constant 1.000000e+00 : f32
    %244 = vector.broadcast %cst_118 : f32 to vector<8x128xf32>
    %245 = arith.addf %244, %243 : vector<8x128xf32>
    %246 = arith.divf %244, %245 : vector<8x128xf32>
    %247 = vector.extract_strided_slice %246 {offsets = [0, 0], sizes = [8, 32], strides = [1, 1]} : vector<8x128xf32> to vector<8x32xf32>
    %248 = vector.extract_strided_slice %246 {offsets = [0, 32], sizes = [8, 32], strides = [1, 1]} : vector<8x128xf32> to vector<8x32xf32>
    %249 = vector.extract_strided_slice %246 {offsets = [0, 96], sizes = [8, 32], strides = [1, 1]} : vector<8x128xf32> to vector<8x32xf32>
    %250 = vector.extract_strided_slice %240 {offsets = [0, 64], sizes = [8, 32], strides = [1, 1]} : vector<8x128xf32> to vector<8x32xf32>
    %251 = math.tanh %250 : vector<8x32xf32>
    %252 = arith.mulf %248, %241 : vector<8x32xf32>
    %253 = arith.mulf %247, %251 : vector<8x32xf32>
    %254 = arith.addf %252, %253 : vector<8x32xf32>
    %255 = math.tanh %254 : vector<8x32xf32>
    %256 = arith.mulf %249, %255 : vector<8x32xf32>
    %c0_119 = arith.constant 0 : index
    %c0_120 = arith.constant 0 : index
    %257 = vector.load %arg9[%c0_119, %c0_120] : memref<8x32xf32, #tpu.memory_space<vmem>>, vector<8x32xf32>
    tpu.vector_store %arg9[%c0_119, %c0_120], %254 {strides = array<i32>} : memref<8x32xf32, #tpu.memory_space<vmem>>, vector<8x32xf32>,
    %c0_121 = arith.constant 0 : index
    %c32_122 = arith.constant 32 : index
    %258 = vector.load %arg7[%c0_121, %c32_122] : memref<8x64xf32, #tpu.memory_space<vmem>>, vector<8x32xf32>
    tpu.vector_store %arg7[%c0_121, %c32_122], %256 {strides = array<i32>} : memref<8x64xf32, #tpu.memory_space<vmem>>, vector<8x32xf32>,
    %259 = arith.index_cast %c4_i32 : i32 to index
    %c0_123 = arith.constant 0 : index
    %c0_124 = arith.constant 0 : index
    %260 = vector.load %arg6[%259, %c0_123, %c0_124] : memref<8x8x32xf32, #tpu.memory_space<vmem>>, vector<1x8x32xf32>
    %261 = vector.shape_cast %260 : vector<1x8x32xf32> to vector<8x32xf32>
    %262 = vector.shape_cast %256 : vector<8x32xf32> to vector<1x8x32xf32>
    tpu.vector_store %arg6[%259, %c0_123, %c0_124], %262 {strides = array<i32>} : memref<8x8x32xf32, #tpu.memory_space<vmem>>, vector<1x8x32xf32>,
    %c5_i32 = arith.constant 5 : i32
    %c0_125 = arith.constant 0 : index
    %c0_126 = arith.constant 0 : index
    %263 = vector.load %arg7[%c0_125, %c0_126] : memref<8x64xf32, #tpu.memory_space<vmem>>, vector<8x32xf32>
    %264 = arith.truncf %263 : vector<8x32xf32> to vector<8x32xbf16>
    %265 = arith.index_cast %c5_i32 : i32 to index
    %c0_127 = arith.constant 0 : index
    %c0_128 = arith.constant 0 : index
    %266 = vector.load %arg2[%265, %c0_127, %c0_128] : memref<8x8x128xf32, #tpu.memory_space<vmem>>, vector<1x8x128xf32>
    %267 = vector.shape_cast %266 : vector<1x8x128xf32> to vector<8x128xf32>
    %cst_129 = arith.constant dense<0.000000e+00> : vector<8x128xf32>
    %268 = tpu.matmul %264, %3, %cst_129 {dimension_numbers = #tpu.dot_dimension_numbers<[1], [0], [0], [1], [0, 0, 1, 1], [], []>} : vector<8x32xbf16>, vector<32x128xbf16>, vector<8x128xf32> -> vector<8x128xf32>
    %269 = arith.addf %267, %268 : vector<8x128xf32>
    %c0_130 = arith.constant 0 : index
    %c0_131 = arith.constant 0 : index
    %270 = vector.load %arg8[%c0_130, %c0_131] : memref<8x32xf32, #tpu.memory_space<vmem>>, vector<8x32xf32>
    %271 = arith.negf %269 : vector<8x128xf32>
    %272 = math.exp %271 : vector<8x128xf32>
    %cst_132 = arith.constant 1.000000e+00 : f32
    %273 = vector.broadcast %cst_132 : f32 to vector<8x128xf32>
    %274 = arith.addf %273, %272 : vector<8x128xf32>
    %275 = arith.divf %273, %274 : vector<8x128xf32>
    %276 = vector.extract_strided_slice %275 {offsets = [0, 0], sizes = [8, 32], strides = [1, 1]} : vector<8x128xf32> to vector<8x32xf32>
    %277 = vector.extract_strided_slice %275 {offsets = [0, 32], sizes = [8, 32], strides = [1, 1]} : vector<8x128xf32> to vector<8x32xf32>
    %278 = vector.extract_strided_slice %275 {offsets = [0, 96], sizes = [8, 32], strides = [1, 1]} : vector<8x128xf32> to vector<8x32xf32>
    %279 = vector.extract_strided_slice %269 {offsets = [0, 64], sizes = [8, 32], strides = [1, 1]} : vector<8x128xf32> to vector<8x32xf32>
    %280 = math.tanh %279 : vector<8x32xf32>
    %281 = arith.mulf %277, %270 : vector<8x32xf32>
    %282 = arith.mulf %276, %280 : vector<8x32xf32>
    %283 = arith.addf %281, %282 : vector<8x32xf32>
    %284 = math.tanh %283 : vector<8x32xf32>
    %285 = arith.mulf %278, %284 : vector<8x32xf32>
    %c0_133 = arith.constant 0 : index
    %c0_134 = arith.constant 0 : index
    %286 = vector.load %arg8[%c0_133, %c0_134] : memref<8x32xf32, #tpu.memory_space<vmem>>, vector<8x32xf32>
    tpu.vector_store %arg8[%c0_133, %c0_134], %283 {strides = array<i32>} : memref<8x32xf32, #tpu.memory_space<vmem>>, vector<8x32xf32>,
    %c0_135 = arith.constant 0 : index
    %c0_136 = arith.constant 0 : index
    %287 = vector.load %arg7[%c0_135, %c0_136] : memref<8x64xf32, #tpu.memory_space<vmem>>, vector<8x32xf32>
    tpu.vector_store %arg7[%c0_135, %c0_136], %285 {strides = array<i32>} : memref<8x64xf32, #tpu.memory_space<vmem>>, vector<8x32xf32>,
    %c0_137 = arith.constant 0 : index
    %c0_138 = arith.constant 0 : index
    %288 = vector.load %arg7[%c0_137, %c0_138] : memref<8x64xf32, #tpu.memory_space<vmem>>, vector<8x64xf32>
    %289 = arith.truncf %288 : vector<8x64xf32> to vector<8x64xbf16>
    %cst_139 = arith.constant dense<0.000000e+00> : vector<8x128xf32>
    %290 = tpu.matmul %289, %4, %cst_139 {dimension_numbers = #tpu.dot_dimension_numbers<[1], [0], [0], [1], [0, 0, 1, 1], [], []>} : vector<8x64xbf16>, vector<64x128xbf16>, vector<8x128xf32> -> vector<8x128xf32>
    %291 = arith.addf %290, %7 : vector<8x128xf32>
    %c0_140 = arith.constant 0 : index
    %c0_141 = arith.constant 0 : index
    %292 = vector.load %arg9[%c0_140, %c0_141] : memref<8x32xf32, #tpu.memory_space<vmem>>, vector<8x32xf32>
    %293 = arith.negf %291 : vector<8x128xf32>
    %294 = math.exp %293 : vector<8x128xf32>
    %cst_142 = arith.constant 1.000000e+00 : f32
    %295 = vector.broadcast %cst_142 : f32 to vector<8x128xf32>
    %296 = arith.addf %295, %294 : vector<8x128xf32>
    %297 = arith.divf %295, %296 : vector<8x128xf32>
    %298 = vector.extract_strided_slice %297 {offsets = [0, 0], sizes = [8, 32], strides = [1, 1]} : vector<8x128xf32> to vector<8x32xf32>
    %299 = vector.extract_strided_slice %297 {offsets = [0, 32], sizes = [8, 32], strides = [1, 1]} : vector<8x128xf32> to vector<8x32xf32>
    %300 = vector.extract_strided_slice %297 {offsets = [0, 96], sizes = [8, 32], strides = [1, 1]} : vector<8x128xf32> to vector<8x32xf32>
    %301 = vector.extract_strided_slice %291 {offsets = [0, 64], sizes = [8, 32], strides = [1, 1]} : vector<8x128xf32> to vector<8x32xf32>
    %302 = math.tanh %301 : vector<8x32xf32>
    %303 = arith.mulf %299, %292 : vector<8x32xf32>
    %304 = arith.mulf %298, %302 : vector<8x32xf32>
    %305 = arith.addf %303, %304 : vector<8x32xf32>
    %306 = math.tanh %305 : vector<8x32xf32>
    %307 = arith.mulf %300, %306 : vector<8x32xf32>
    %c0_143 = arith.constant 0 : index
    %c0_144 = arith.constant 0 : index
    %308 = vector.load %arg9[%c0_143, %c0_144] : memref<8x32xf32, #tpu.memory_space<vmem>>, vector<8x32xf32>
    tpu.vector_store %arg9[%c0_143, %c0_144], %305 {strides = array<i32>} : memref<8x32xf32, #tpu.memory_space<vmem>>, vector<8x32xf32>,
    %c0_145 = arith.constant 0 : index
    %c32_146 = arith.constant 32 : index
    %309 = vector.load %arg7[%c0_145, %c32_146] : memref<8x64xf32, #tpu.memory_space<vmem>>, vector<8x32xf32>
    tpu.vector_store %arg7[%c0_145, %c32_146], %307 {strides = array<i32>} : memref<8x64xf32, #tpu.memory_space<vmem>>, vector<8x32xf32>,
    %310 = arith.index_cast %c5_i32 : i32 to index
    %c0_147 = arith.constant 0 : index
    %c0_148 = arith.constant 0 : index
    %311 = vector.load %arg6[%310, %c0_147, %c0_148] : memref<8x8x32xf32, #tpu.memory_space<vmem>>, vector<1x8x32xf32>
    %312 = vector.shape_cast %311 : vector<1x8x32xf32> to vector<8x32xf32>
    %313 = vector.shape_cast %307 : vector<8x32xf32> to vector<1x8x32xf32>
    tpu.vector_store %arg6[%310, %c0_147, %c0_148], %313 {strides = array<i32>} : memref<8x8x32xf32, #tpu.memory_space<vmem>>, vector<1x8x32xf32>,
    %c6_i32 = arith.constant 6 : i32
    %c0_149 = arith.constant 0 : index
    %c0_150 = arith.constant 0 : index
    %314 = vector.load %arg7[%c0_149, %c0_150] : memref<8x64xf32, #tpu.memory_space<vmem>>, vector<8x32xf32>
    %315 = arith.truncf %314 : vector<8x32xf32> to vector<8x32xbf16>
    %316 = arith.index_cast %c6_i32 : i32 to index
    %c0_151 = arith.constant 0 : index
    %c0_152 = arith.constant 0 : index
    %317 = vector.load %arg2[%316, %c0_151, %c0_152] : memref<8x8x128xf32, #tpu.memory_space<vmem>>, vector<1x8x128xf32>
    %318 = vector.shape_cast %317 : vector<1x8x128xf32> to vector<8x128xf32>
    %cst_153 = arith.constant dense<0.000000e+00> : vector<8x128xf32>
    %319 = tpu.matmul %315, %3, %cst_153 {dimension_numbers = #tpu.dot_dimension_numbers<[1], [0], [0], [1], [0, 0, 1, 1], [], []>} : vector<8x32xbf16>, vector<32x128xbf16>, vector<8x128xf32> -> vector<8x128xf32>
    %320 = arith.addf %318, %319 : vector<8x128xf32>
    %c0_154 = arith.constant 0 : index
    %c0_155 = arith.constant 0 : index
    %321 = vector.load %arg8[%c0_154, %c0_155] : memref<8x32xf32, #tpu.memory_space<vmem>>, vector<8x32xf32>
    %322 = arith.negf %320 : vector<8x128xf32>
    %323 = math.exp %322 : vector<8x128xf32>
    %cst_156 = arith.constant 1.000000e+00 : f32
    %324 = vector.broadcast %cst_156 : f32 to vector<8x128xf32>
    %325 = arith.addf %324, %323 : vector<8x128xf32>
    %326 = arith.divf %324, %325 : vector<8x128xf32>
    %327 = vector.extract_strided_slice %326 {offsets = [0, 0], sizes = [8, 32], strides = [1, 1]} : vector<8x128xf32> to vector<8x32xf32>
    %328 = vector.extract_strided_slice %326 {offsets = [0, 32], sizes = [8, 32], strides = [1, 1]} : vector<8x128xf32> to vector<8x32xf32>
    %329 = vector.extract_strided_slice %326 {offsets = [0, 96], sizes = [8, 32], strides = [1, 1]} : vector<8x128xf32> to vector<8x32xf32>
    %330 = vector.extract_strided_slice %320 {offsets = [0, 64], sizes = [8, 32], strides = [1, 1]} : vector<8x128xf32> to vector<8x32xf32>
    %331 = math.tanh %330 : vector<8x32xf32>
    %332 = arith.mulf %328, %321 : vector<8x32xf32>
    %333 = arith.mulf %327, %331 : vector<8x32xf32>
    %334 = arith.addf %332, %333 : vector<8x32xf32>
    %335 = math.tanh %334 : vector<8x32xf32>
    %336 = arith.mulf %329, %335 : vector<8x32xf32>
    %c0_157 = arith.constant 0 : index
    %c0_158 = arith.constant 0 : index
    %337 = vector.load %arg8[%c0_157, %c0_158] : memref<8x32xf32, #tpu.memory_space<vmem>>, vector<8x32xf32>
    tpu.vector_store %arg8[%c0_157, %c0_158], %334 {strides = array<i32>} : memref<8x32xf32, #tpu.memory_space<vmem>>, vector<8x32xf32>,
    %c0_159 = arith.constant 0 : index
    %c0_160 = arith.constant 0 : index
    %338 = vector.load %arg7[%c0_159, %c0_160] : memref<8x64xf32, #tpu.memory_space<vmem>>, vector<8x32xf32>
    tpu.vector_store %arg7[%c0_159, %c0_160], %336 {strides = array<i32>} : memref<8x64xf32, #tpu.memory_space<vmem>>, vector<8x32xf32>,
    %c0_161 = arith.constant 0 : index
    %c0_162 = arith.constant 0 : index
    %339 = vector.load %arg7[%c0_161, %c0_162] : memref<8x64xf32, #tpu.memory_space<vmem>>, vector<8x64xf32>
    %340 = arith.truncf %339 : vector<8x64xf32> to vector<8x64xbf16>
    %cst_163 = arith.constant dense<0.000000e+00> : vector<8x128xf32>
    %341 = tpu.matmul %340, %4, %cst_163 {dimension_numbers = #tpu.dot_dimension_numbers<[1], [0], [0], [1], [0, 0, 1, 1], [], []>} : vector<8x64xbf16>, vector<64x128xbf16>, vector<8x128xf32> -> vector<8x128xf32>
    %342 = arith.addf %341, %7 : vector<8x128xf32>
    %c0_164 = arith.constant 0 : index
    %c0_165 = arith.constant 0 : index
    %343 = vector.load %arg9[%c0_164, %c0_165] : memref<8x32xf32, #tpu.memory_space<vmem>>, vector<8x32xf32>
    %344 = arith.negf %342 : vector<8x128xf32>
    %345 = math.exp %344 : vector<8x128xf32>
    %cst_166 = arith.constant 1.000000e+00 : f32
    %346 = vector.broadcast %cst_166 : f32 to vector<8x128xf32>
    %347 = arith.addf %346, %345 : vector<8x128xf32>
    %348 = arith.divf %346, %347 : vector<8x128xf32>
    %349 = vector.extract_strided_slice %348 {offsets = [0, 0], sizes = [8, 32], strides = [1, 1]} : vector<8x128xf32> to vector<8x32xf32>
    %350 = vector.extract_strided_slice %348 {offsets = [0, 32], sizes = [8, 32], strides = [1, 1]} : vector<8x128xf32> to vector<8x32xf32>
    %351 = vector.extract_strided_slice %348 {offsets = [0, 96], sizes = [8, 32], strides = [1, 1]} : vector<8x128xf32> to vector<8x32xf32>
    %352 = vector.extract_strided_slice %342 {offsets = [0, 64], sizes = [8, 32], strides = [1, 1]} : vector<8x128xf32> to vector<8x32xf32>
    %353 = math.tanh %352 : vector<8x32xf32>
    %354 = arith.mulf %350, %343 : vector<8x32xf32>
    %355 = arith.mulf %349, %353 : vector<8x32xf32>
    %356 = arith.addf %354, %355 : vector<8x32xf32>
    %357 = math.tanh %356 : vector<8x32xf32>
    %358 = arith.mulf %351, %357 : vector<8x32xf32>
    %c0_167 = arith.constant 0 : index
    %c0_168 = arith.constant 0 : index
    %359 = vector.load %arg9[%c0_167, %c0_168] : memref<8x32xf32, #tpu.memory_space<vmem>>, vector<8x32xf32>
    tpu.vector_store %arg9[%c0_167, %c0_168], %356 {strides = array<i32>} : memref<8x32xf32, #tpu.memory_space<vmem>>, vector<8x32xf32>,
    %c0_169 = arith.constant 0 : index
    %c32_170 = arith.constant 32 : index
    %360 = vector.load %arg7[%c0_169, %c32_170] : memref<8x64xf32, #tpu.memory_space<vmem>>, vector<8x32xf32>
    tpu.vector_store %arg7[%c0_169, %c32_170], %358 {strides = array<i32>} : memref<8x64xf32, #tpu.memory_space<vmem>>, vector<8x32xf32>,
    %361 = arith.index_cast %c6_i32 : i32 to index
    %c0_171 = arith.constant 0 : index
    %c0_172 = arith.constant 0 : index
    %362 = vector.load %arg6[%361, %c0_171, %c0_172] : memref<8x8x32xf32, #tpu.memory_space<vmem>>, vector<1x8x32xf32>
    %363 = vector.shape_cast %362 : vector<1x8x32xf32> to vector<8x32xf32>
    %364 = vector.shape_cast %358 : vector<8x32xf32> to vector<1x8x32xf32>
    tpu.vector_store %arg6[%361, %c0_171, %c0_172], %364 {strides = array<i32>} : memref<8x8x32xf32, #tpu.memory_space<vmem>>, vector<1x8x32xf32>,
    %c7_i32 = arith.constant 7 : i32
    %c0_173 = arith.constant 0 : index
    %c0_174 = arith.constant 0 : index
    %365 = vector.load %arg7[%c0_173, %c0_174] : memref<8x64xf32, #tpu.memory_space<vmem>>, vector<8x32xf32>
    %366 = arith.truncf %365 : vector<8x32xf32> to vector<8x32xbf16>
    %367 = arith.index_cast %c7_i32 : i32 to index
    %c0_175 = arith.constant 0 : index
    %c0_176 = arith.constant 0 : index
    %368 = vector.load %arg2[%367, %c0_175, %c0_176] : memref<8x8x128xf32, #tpu.memory_space<vmem>>, vector<1x8x128xf32>
    %369 = vector.shape_cast %368 : vector<1x8x128xf32> to vector<8x128xf32>
    %cst_177 = arith.constant dense<0.000000e+00> : vector<8x128xf32>
    %370 = tpu.matmul %366, %3, %cst_177 {dimension_numbers = #tpu.dot_dimension_numbers<[1], [0], [0], [1], [0, 0, 1, 1], [], []>} : vector<8x32xbf16>, vector<32x128xbf16>, vector<8x128xf32> -> vector<8x128xf32>
    %371 = arith.addf %369, %370 : vector<8x128xf32>
    %c0_178 = arith.constant 0 : index
    %c0_179 = arith.constant 0 : index
    %372 = vector.load %arg8[%c0_178, %c0_179] : memref<8x32xf32, #tpu.memory_space<vmem>>, vector<8x32xf32>
    %373 = arith.negf %371 : vector<8x128xf32>
    %374 = math.exp %373 : vector<8x128xf32>
    %cst_180 = arith.constant 1.000000e+00 : f32
    %375 = vector.broadcast %cst_180 : f32 to vector<8x128xf32>
    %376 = arith.addf %375, %374 : vector<8x128xf32>
    %377 = arith.divf %375, %376 : vector<8x128xf32>
    %378 = vector.extract_strided_slice %377 {offsets = [0, 0], sizes = [8, 32], strides = [1, 1]} : vector<8x128xf32> to vector<8x32xf32>
    %379 = vector.extract_strided_slice %377 {offsets = [0, 32], sizes = [8, 32], strides = [1, 1]} : vector<8x128xf32> to vector<8x32xf32>
    %380 = vector.extract_strided_slice %377 {offsets = [0, 96], sizes = [8, 32], strides = [1, 1]} : vector<8x128xf32> to vector<8x32xf32>
    %381 = vector.extract_strided_slice %371 {offsets = [0, 64], sizes = [8, 32], strides = [1, 1]} : vector<8x128xf32> to vector<8x32xf32>
    %382 = math.tanh %381 : vector<8x32xf32>
    %383 = arith.mulf %379, %372 : vector<8x32xf32>
    %384 = arith.mulf %378, %382 : vector<8x32xf32>
    %385 = arith.addf %383, %384 : vector<8x32xf32>
    %386 = math.tanh %385 : vector<8x32xf32>
    %387 = arith.mulf %380, %386 : vector<8x32xf32>
    %c0_181 = arith.constant 0 : index
    %c0_182 = arith.constant 0 : index
    %388 = vector.load %arg8[%c0_181, %c0_182] : memref<8x32xf32, #tpu.memory_space<vmem>>, vector<8x32xf32>
    tpu.vector_store %arg8[%c0_181, %c0_182], %385 {strides = array<i32>} : memref<8x32xf32, #tpu.memory_space<vmem>>, vector<8x32xf32>,
    %c0_183 = arith.constant 0 : index
    %c0_184 = arith.constant 0 : index
    %389 = vector.load %arg7[%c0_183, %c0_184] : memref<8x64xf32, #tpu.memory_space<vmem>>, vector<8x32xf32>
    tpu.vector_store %arg7[%c0_183, %c0_184], %387 {strides = array<i32>} : memref<8x64xf32, #tpu.memory_space<vmem>>, vector<8x32xf32>,
    %c0_185 = arith.constant 0 : index
    %c0_186 = arith.constant 0 : index
    %390 = vector.load %arg7[%c0_185, %c0_186] : memref<8x64xf32, #tpu.memory_space<vmem>>, vector<8x64xf32>
    %391 = arith.truncf %390 : vector<8x64xf32> to vector<8x64xbf16>
    %cst_187 = arith.constant dense<0.000000e+00> : vector<8x128xf32>
    %392 = tpu.matmul %391, %4, %cst_187 {dimension_numbers = #tpu.dot_dimension_numbers<[1], [0], [0], [1], [0, 0, 1, 1], [], []>} : vector<8x64xbf16>, vector<64x128xbf16>, vector<8x128xf32> -> vector<8x128xf32>
    %393 = arith.addf %392, %7 : vector<8x128xf32>
    %c0_188 = arith.constant 0 : index
    %c0_189 = arith.constant 0 : index
    %394 = vector.load %arg9[%c0_188, %c0_189] : memref<8x32xf32, #tpu.memory_space<vmem>>, vector<8x32xf32>
    %395 = arith.negf %393 : vector<8x128xf32>
    %396 = math.exp %395 : vector<8x128xf32>
    %cst_190 = arith.constant 1.000000e+00 : f32
    %397 = vector.broadcast %cst_190 : f32 to vector<8x128xf32>
    %398 = arith.addf %397, %396 : vector<8x128xf32>
    %399 = arith.divf %397, %398 : vector<8x128xf32>
    %400 = vector.extract_strided_slice %399 {offsets = [0, 0], sizes = [8, 32], strides = [1, 1]} : vector<8x128xf32> to vector<8x32xf32>
    %401 = vector.extract_strided_slice %399 {offsets = [0, 32], sizes = [8, 32], strides = [1, 1]} : vector<8x128xf32> to vector<8x32xf32>
    %402 = vector.extract_strided_slice %399 {offsets = [0, 96], sizes = [8, 32], strides = [1, 1]} : vector<8x128xf32> to vector<8x32xf32>
    %403 = vector.extract_strided_slice %393 {offsets = [0, 64], sizes = [8, 32], strides = [1, 1]} : vector<8x128xf32> to vector<8x32xf32>
    %404 = math.tanh %403 : vector<8x32xf32>
    %405 = arith.mulf %401, %394 : vector<8x32xf32>
    %406 = arith.mulf %400, %404 : vector<8x32xf32>
    %407 = arith.addf %405, %406 : vector<8x32xf32>
    %408 = math.tanh %407 : vector<8x32xf32>
    %409 = arith.mulf %402, %408 : vector<8x32xf32>
    %c0_191 = arith.constant 0 : index
    %c0_192 = arith.constant 0 : index
    %410 = vector.load %arg9[%c0_191, %c0_192] : memref<8x32xf32, #tpu.memory_space<vmem>>, vector<8x32xf32>
    tpu.vector_store %arg9[%c0_191, %c0_192], %407 {strides = array<i32>} : memref<8x32xf32, #tpu.memory_space<vmem>>, vector<8x32xf32>,
    %c0_193 = arith.constant 0 : index
    %c32_194 = arith.constant 32 : index
    %411 = vector.load %arg7[%c0_193, %c32_194] : memref<8x64xf32, #tpu.memory_space<vmem>>, vector<8x32xf32>
    tpu.vector_store %arg7[%c0_193, %c32_194], %409 {strides = array<i32>} : memref<8x64xf32, #tpu.memory_space<vmem>>, vector<8x32xf32>,
    %412 = arith.index_cast %c7_i32 : i32 to index
    %c0_195 = arith.constant 0 : index
    %c0_196 = arith.constant 0 : index
    %413 = vector.load %arg6[%412, %c0_195, %c0_196] : memref<8x8x32xf32, #tpu.memory_space<vmem>>, vector<1x8x32xf32>
    %414 = vector.shape_cast %413 : vector<1x8x32xf32> to vector<8x32xf32>
    %415 = vector.shape_cast %409 : vector<8x32xf32> to vector<1x8x32xf32>
    tpu.vector_store %arg6[%412, %c0_195, %c0_196], %415 {strides = array<i32>} : memref<8x8x32xf32, #tpu.memory_space<vmem>>, vector<1x8x32xf32>,
    %c8_i32 = arith.constant 8 : i32
    return
  }
  func.func @transform_0(%arg0: i32, %arg1: i32) -> (i32, i32, i32) {
    %c0_i32 = arith.constant 0 : i32
    %c0_i32_0 = arith.constant 0 : i32
    return %arg1, %arg0, %c0_i32 : i32, i32, i32
  }
  func.func @transform_1(%arg0: i32, %arg1: i32) -> (i32, i32) {
    %c0_i32 = arith.constant 0 : i32
    %c0_i32_0 = arith.constant 0 : i32
    %c0_i32_1 = arith.constant 0 : i32
    return %c0_i32, %c0_i32_0 : i32, i32
  }
  func.func @transform_2(%arg0: i32, %arg1: i32) -> (i32, i32) {
    %c0_i32 = arith.constant 0 : i32
    %c0_i32_0 = arith.constant 0 : i32
    %c0_i32_1 = arith.constant 0 : i32
    return %c0_i32, %c0_i32_0 : i32, i32
  }
  func.func @transform_3(%arg0: i32, %arg1: i32) -> (i32, i32) {
    %c0_i32 = arith.constant 0 : i32
    %c0_i32_0 = arith.constant 0 : i32
    %c0_i32_1 = arith.constant 0 : i32
    return %c0_i32, %c0_i32_0 : i32, i32
  }
  func.func @transform_4(%arg0: i32, %arg1: i32) -> (i32, i32, i32) {
    %c0_i32 = arith.constant 0 : i32
    %c0_i32_0 = arith.constant 0 : i32
    return %arg1, %arg0, %c0_i32 : i32, i32, i32
  }
}

</mosaic_0001>

<llo_original>
// kernel: lstm_net_forward.3
$region0: #{lstm_net_forward.3}
  #allocation0 [shape = 'u32[]', space=smem, size = 0x4, offset = 0x4, fixed_abs, tag = 'smem constant byte address 0x4 - core index']
  #allocation1 [shape = 'u32[72,128]{1,0:T(1,128)}', space=vmem, size = 0x9000, scoped, tag = 'internal scratch']
  %s0 = inlined_call_operand.vmem [shape: f32[64,32], index: 0, kind: input, shape index: {}]
  %s1 = inlined_call_operand.vmem [shape: f32[32,128], index: 1, kind: input, shape index: {}]
  %s2 = inlined_call_operand.vmem [shape: f32[1,128], index: 2, kind: input, shape index: {}]
  %s3 = inlined_call_operand.vmem [shape: f32[64,128], index: 3, kind: output, shape index: {}]
  %s4 = sld [smem:[#allocation0]]
  $region22: #{lstm_net_forward.3} parent=0
    _
  %s6 = ssub.s32 1, %s4
  %s7 = scalar_select 0, %s6, %s4
  // Predicated region
  $region2: #{lstm_net_forward.3} parent=0 // pred_check
    _
  $region3: #{lstm_net_forward.3} parent=0 // pred_check_branch
    %9 = sbr.rel (0) target = $region5
  $region4: #{lstm_net_forward.3} parent=0 // pred_region
    _
  $region5: #{lstm_net_forward.3} parent=0 // pred_fallthru
    _
  // Predicated region
  $region6: #{lstm_net_forward.3} parent=0 // pred_check
    _
  $region7: #{lstm_net_forward.3} parent=0 // pred_check_branch
    %11 = sbr.rel (0) target = $region9
  $region8: #{lstm_net_forward.3} parent=0 // pred_region
    _
  $region9: #{lstm_net_forward.3} parent=0 // pred_fallthru
    _
  // Predicated region
  $region10: #{lstm_net_forward.3} parent=0 // pred_check
    _
  $region11: #{lstm_net_forward.3} parent=0 // pred_check_branch
    %13 = sbr.rel (0) target = $region13
  $region12: #{lstm_net_forward.3} parent=0 // pred_region
    _
  $region13: #{lstm_net_forward.3} parent=0 // pred_fallthru
    _
  %v14 = vld [vmem:[%s0] sm:$0xff]
  %v15 = vld [vmem:[%s0 + $0x8] sm:$0xff]
  %v16 = vld [vmem:[%s0 + $0x10] sm:$0xff]
  %v17 = vld [vmem:[%s0 + $0x18] sm:$0xff]
  %v18 = vld [vmem:[%s0 + $0x20] sm:$0xff]
  %v19 = vld [vmem:[%s0 + $0x28] sm:$0xff]
  %v20 = vld [vmem:[%s0 + $0x30] sm:$0xff]
  %v21 = vld [vmem:[%s0 + $0x38] sm:$0xff]
  %v22 = vmax.f32 %v14, 0.0
  %v23 = vmax.f32 %v15, 0.0
  %v24 = vmax.f32 %v16, 0.0
  %v25 = vmax.f32 %v17, 0.0
  %v26 = vmax.f32 %v18, 0.0
  %v27 = vmax.f32 %v19, 0.0
  %v28 = vmax.f32 %v20, 0.0
  %v29 = vmax.f32 %v21, 0.0
  %v30 = vld [vmem:[%s1] sm:$0xff]
  %v31 = vld [vmem:[%s1 + $0x8] sm:$0xff]
  %v32 = vld [vmem:[%s1 + $0x10] sm:$0xff]
  %v33 = vld [vmem:[%s1 + $0x18] sm:$0xff]
  %v34 = vld [vmem:[%s2] sm:$0x1]
  %v36 = vperm.slane %v34, 0
  %vm38 = vcmask 261120
  %v40 = vsel %vm38, %v22, 0
  %v43 = vsel %vm38, %v23, 0
  %v46 = vsel %vm38, %v24, 0
  %v49 = vsel %vm38, %v25, 0
  %v52 = vsel %vm38, %v26, 0
  %v55 = vsel %vm38, %v27, 0
  %v58 = vsel %vm38, %v28, 0
  %v61 = vsel %vm38, %v29, 0
  %63 = vmatpush.msra.mxu0 0.0
  %64 = vmatpush.msra.mxu0 0.0
  %65 = vmatpush.msra.mxu0 0.0
  %66 = vmatpush.msra.mxu0 0.0
  %67 = vmatpush.msra.mxu0 0.0
  %68 = vmatpush.msra.mxu0 0.0
  %69 = vmatpush.msra.mxu0 0.0
  %70 = vmatpush.msra.mxu0 0.0
  %71 = vmatpush.msra.mxu0 0.0
  %72 = vmatpush.msra.mxu0 0.0
  %73 = vmatpush.msra.mxu0 0.0
  %74 = vmatpush.msra.mxu0 0.0
  %75 = vmatpush.msra.mxu0 %v33
  %76 = vmatpush.msra.mxu0 %v32
  %77 = vmatpush.msra.mxu0 %v31
  %78 = vmatpush.msra.mxu0 %v30
  %79 = vmatmul.f32.gmra.mxu0 %v40
  %v80 = vpop.f32.mrf.mxu0
  %v81 = vadd.f32 %v36, %v80
  %82 = vmatmul.f32.gmra.mxu0 %v43
  %v83 = vpop.f32.mrf.mxu0
  %v84 = vadd.f32 %v36, %v83
  %85 = vmatmul.f32.gmra.mxu0 %v46
  %v86 = vpop.f32.mrf.mxu0
  %v87 = vadd.f32 %v36, %v86
  %88 = vmatmul.f32.gmra.mxu0 %v49
  %v89 = vpop.f32.mrf.mxu0
  %v90 = vadd.f32 %v36, %v89
  %91 = vmatmul.f32.gmra.mxu0 %v52
  %v92 = vpop.f32.mrf.mxu0
  %v93 = vadd.f32 %v36, %v92
  %94 = vmatmul.f32.gmra.mxu0 %v55
  %v95 = vpop.f32.mrf.mxu0
  %v96 = vadd.f32 %v36, %v95
  %97 = vmatmul.f32.gmra.mxu0 %v58
  %v98 = vpop.f32.mrf.mxu0
  %v99 = vadd.f32 %v36, %v98
  %100 = vmatmul.f32.gmra.mxu0 %v61
  %v101 = vpop.f32.mrf.mxu0
  %v102 = vadd.f32 %v36, %v101
  %103 = vdwg.mxu0
  %104 = vmax.xlane.f32.xlu0 %v81
  %v105 = vpop.xlane.xlu0 %104
  %106 = vmax.xlane.f32.xlu0 %v84
  %v107 = vpop.xlane.xlu0 %106
  %108 = vmax.xlane.f32.xlu0 %v87
  %v109 = vpop.xlane.xlu0 %108
  %110 = vmax.xlane.f32.xlu0 %v90
  %v111 = vpop.xlane.xlu0 %110
  %112 = vmax.xlane.f32.xlu0 %v93
  %v113 = vpop.xlane.xlu0 %112
  %114 = vmax.xlane.f32.xlu0 %v96
  %v115 = vpop.xlane.xlu0 %114
  %116 = vmax.xlane.f32.xlu0 %v99
  %v117 = vpop.xlane.xlu0 %116
  %118 = vmax.xlane.f32.xlu0 %v102
  %v119 = vpop.xlane.xlu0 %118
  %v120 = vsub.f32 %v81, %v105
  %v121 = vsub.f32 %v84, %v107
  %v122 = vsub.f32 %v87, %v109
  %v123 = vsub.f32 %v90, %v111
  %v124 = vsub.f32 %v93, %v113
  %v125 = vsub.f32 %v96, %v115
  %v126 = vsub.f32 %v99, %v117
  %v127 = vsub.f32 %v102, %v119
  %v128 = vmul.f32 %v120, 1.442695
  %v129 = vpow.pop %v128
  %v130 = vmul.f32 %v121, 1.442695
  %v131 = vpow.pop %v130
  %v132 = vmul.f32 %v122, 1.442695
  %v133 = vpow.pop %v132
  %v134 = vmul.f32 %v123, 1.442695
  %v135 = vpow.pop %v134
  %v136 = vmul.f32 %v124, 1.442695
  %v137 = vpow.pop %v136
  %v138 = vmul.f32 %v125, 1.442695
  %v139 = vpow.pop %v138
  %v140 = vmul.f32 %v126, 1.442695
  %v141 = vpow.pop %v140
  %v142 = vmul.f32 %v127, 1.442695
  %v143 = vpow.pop %v142
  %144 = vadd.xlane.f32.xlu0 %v129
  %v145 = vpop.xlane.xlu0 %144
  %146 = vadd.xlane.f32.xlu0 %v131
  %v147 = vpop.xlane.xlu0 %146
  %148 = vadd.xlane.f32.xlu0 %v133
  %v149 = vpop.xlane.xlu0 %148
  %150 = vadd.xlane.f32.xlu0 %v135
  %v151 = vpop.xlane.xlu0 %150
  %152 = vadd.xlane.f32.xlu0 %v137
  %v153 = vpop.xlane.xlu0 %152
  %154 = vadd.xlane.f32.xlu0 %v139
  %v155 = vpop.xlane.xlu0 %154
  %156 = vadd.xlane.f32.xlu0 %v141
  %v157 = vpop.xlane.xlu0 %156
  %158 = vadd.xlane.f32.xlu0 %v143
  %v159 = vpop.xlane.xlu0 %158
  %v160 = vrcp.pop %v145
  %v161 = vmul.f32 %v145, %v160
  %v162 = vsub.f32 1.0, %v161
  %v163 = vmul.f32 %v160, %v162
  %v164 = vadd.f32 %v160, %v163
  %vm165 = vweird.f32 %v145
  %vm166 = vweird.f32 %v160
  %vm167 = vmor %vm165, %vm166
  %v168 = vsel %vm167, %v160, %v164
  %v169 = vand.u32 2147483647, %v145
  %vm170 = vcmp.eq.f32.partialorder %v169, 8.507059e+37
  %v171 = vand.u32 %v145, 2147483648
  %v172 = vor.u32 1.1754944e-38, %v171
  %v173 = vsel %vm170, %v172, %v168
  %v174 = vrcp.pop %v147
  %v175 = vmul.f32 %v147, %v174
  %v176 = vsub.f32 1.0, %v175
  %v177 = vmul.f32 %v174, %v176
  %v178 = vadd.f32 %v174, %v177
  %vm179 = vweird.f32 %v147
  %vm180 = vweird.f32 %v174
  %vm181 = vmor %vm179, %vm180
  %v182 = vsel %vm181, %v174, %v178
  %v183 = vand.u32 2147483647, %v147
  %vm184 = vcmp.eq.f32.partialorder %v183, 8.507059e+37
  %v185 = vand.u32 %v147, 2147483648
  %v186 = vor.u32 1.1754944e-38, %v185
  %v187 = vsel %vm184, %v186, %v182
  %v188 = vrcp.pop %v149
  %v189 = vmul.f32 %v149, %v188
  %v190 = vsub.f32 1.0, %v189
  %v191 = vmul.f32 %v188, %v190
  %v192 = vadd.f32 %v188, %v191
  %vm193 = vweird.f32 %v149
  %vm194 = vweird.f32 %v188
  %vm195 = vmor %vm193, %vm194
  %v196 = vsel %vm195, %v188, %v192
  %v197 = vand.u32 2147483647, %v149
  %vm198 = vcmp.eq.f32.partialorder %v197, 8.507059e+37
  %v199 = vand.u32 %v149, 2147483648
  %v200 = vor.u32 1.1754944e-38, %v199
  %v201 = vsel %vm198, %v200, %v196
  %v202 = vrcp.pop %v151
  %v203 = vmul.f32 %v151, %v202
  %v204 = vsub.f32 1.0, %v203
  %v205 = vmul.f32 %v202, %v204
  %v206 = vadd.f32 %v202, %v205
  %vm207 = vweird.f32 %v151
  %vm208 = vweird.f32 %v202
  %vm209 = vmor %vm207, %vm208
  %v210 = vsel %vm209, %v202, %v206
  %v211 = vand.u32 2147483647, %v151
  %vm212 = vcmp.eq.f32.partialorder %v211, 8.507059e+37
  %v213 = vand.u32 %v151, 2147483648
  %v214 = vor.u32 1.1754944e-38, %v213
  %v215 = vsel %vm212, %v214, %v210
  %v216 = vrcp.pop %v153
  %v217 = vmul.f32 %v153, %v216
  %v218 = vsub.f32 1.0, %v217
  %v219 = vmul.f32 %v216, %v218
  %v220 = vadd.f32 %v216, %v219
  %vm221 = vweird.f32 %v153
  %vm222 = vweird.f32 %v216
  %vm223 = vmor %vm221, %vm222
  %v224 = vsel %vm223, %v216, %v220
  %v225 = vand.u32 2147483647, %v153
  %vm226 = vcmp.eq.f32.partialorder %v225, 8.507059e+37
  %v227 = vand.u32 %v153, 2147483648
  %v228 = vor.u32 1.1754944e-38, %v227
  %v229 = vsel %vm226, %v228, %v224
  %v230 = vrcp.pop %v155
  %v231 = vmul.f32 %v155, %v230
  %v232 = vsub.f32 1.0, %v231
  %v233 = vmul.f32 %v230, %v232
  %v234 = vadd.f32 %v230, %v233
  %vm235 = vweird.f32 %v155
  %vm236 = vweird.f32 %v230
  %vm237 = vmor %vm235, %vm236
  %v238 = vsel %vm237, %v230, %v234
  %v239 = vand.u32 2147483647, %v155
  %vm240 = vcmp.eq.f32.partialorder %v239, 8.507059e+37
  %v241 = vand.u32 %v155, 2147483648
  %v242 = vor.u32 1.1754944e-38, %v241
  %v243 = vsel %vm240, %v242, %v238
  %v244 = vrcp.pop %v157
  %v245 = vmul.f32 %v157, %v244
  %v246 = vsub.f32 1.0, %v245
  %v247 = vmul.f32 %v244, %v246
  %v248 = vadd.f32 %v244, %v247
  %vm249 = vweird.f32 %v157
  %vm250 = vweird.f32 %v244
  %vm251 = vmor %vm249, %vm250
  %v252 = vsel %vm251, %v244, %v248
  %v253 = vand.u32 2147483647, %v157
  %vm254 = vcmp.eq.f32.partialorder %v253, 8.507059e+37
  %v255 = vand.u32 %v157, 2147483648
  %v256 = vor.u32 1.1754944e-38, %v255
  %v257 = vsel %vm254, %v256, %v252
  %v258 = vrcp.pop %v159
  %v259 = vmul.f32 %v159, %v258
  %v260 = vsub.f32 1.0, %v259
  %v261 = vmul.f32 %v258, %v260
  %v262 = vadd.f32 %v258, %v261
  %vm263 = vweird.f32 %v159
  %vm264 = vweird.f32 %v258
  %vm265 = vmor %vm263, %vm264
  %v266 = vsel %vm265, %v258, %v262
  %v267 = vand.u32 2147483647, %v159
  %vm268 = vcmp.eq.f32.partialorder %v267, 8.507059e+37
  %v269 = vand.u32 %v159, 2147483648
  %v270 = vor.u32 1.1754944e-38, %v269
  %v271 = vsel %vm268, %v270, %v266
  %v272 = vmul.f32 %v129, %v173
  %v273 = vmul.f32 %v131, %v187
  %v274 = vmul.f32 %v133, %v201
  %v275 = vmul.f32 %v135, %v215
  %v276 = vmul.f32 %v137, %v229
  %v277 = vmul.f32 %v139, %v243
  %v278 = vmul.f32 %v141, %v257
  %v279 = vmul.f32 %v143, %v271
  %280 = vst [vmem:[%s3] sm:$0xff] %v272
  %281 = vst [vmem:[%s3 + $0x8] sm:$0xff] %v273
  %282 = vst [vmem:[%s3 + $0x10] sm:$0xff] %v274
  %283 = vst [vmem:[%s3 + $0x18] sm:$0xff] %v275
  %284 = vst [vmem:[%s3 + $0x20] sm:$0xff] %v276
  %285 = vst [vmem:[%s3 + $0x28] sm:$0xff] %v277
  %286 = vst [vmem:[%s3 + $0x30] sm:$0xff] %v278
  %287 = vst [vmem:[%s3 + $0x38] sm:$0xff] %v279
  // Predicated region
  $region14: #{lstm_net_forward.3} parent=0 // pred_check
    _
  $region15: #{lstm_net_forward.3} parent=0 // pred_check_branch
    %289 = sbr.rel (0) target = $region17
  $region16: #{lstm_net_forward.3} parent=0 // pred_region
    _
  $region17: #{lstm_net_forward.3} parent=0 // pred_fallthru
    _
  // Predicated region
  $region18: #{lstm_net_forward.3} parent=0 // pred_check
    _
  $region19: #{lstm_net_forward.3} parent=0 // pred_check_branch
    %291 = sbr.rel (0) target = $region21
  $region20: #{lstm_net_forward.3} parent=0 // pred_region
    _
  $region21: #{lstm_net_forward.3} parent=0 // pred_fallthru
    _

// kernel: lstm_net_forward.2
$region0: #{lstm_net_forward.2}
  #allocation0 [shape = 'u32[]', space=smem, size = 0x4, offset = 0x4, fixed_abs, tag = 'smem constant byte address 0x4 - core index']
  #allocation1 [shape = 'u32[72,128]{1,0:T(1,128)}', space=vmem, size = 0x9000, scoped, tag = 'internal scratch']
  #allocation2 [shape = 'f32[8,64]{1,0:T(8,128)}', space=vmem, size = 0x1000, scoped, tag = 'scratch operand']
  #allocation3 [shape = 'f32[8,32]{1,0:T(8,128)}', space=vmem, size = 0x1000, scoped, tag = 'scratch operand']
  #allocation4 [shape = 'f32[8,32]{1,0:T(8,128)}', space=vmem, size = 0x1000, scoped, tag = 'scratch operand']
  %s0 = inlined_call_operand.vmem [shape: f32[8,8,128], index: 0, kind: input, shape index: {}]
  %s1 = inlined_call_operand.vmem [shape: bf16[32,128], index: 1, kind: input, shape index: {}]
  %s2 = inlined_call_operand.vmem [shape: bf16[64,128], index: 2, kind: input, shape index: {}]
  %s3 = inlined_call_operand.vmem [shape: f32[1,128], index: 3, kind: input, shape index: {}]
  %s4 = inlined_call_operand.vmem [shape: f32[8,8,32], index: 4, kind: output, shape index: {}]
  %s5 = sld [smem:[#allocation0]]
  $region30: #{lstm_net_forward.2} parent=0
    _
  %s7 = ssub.s32 1, %s5
  %s8 = scalar_select 0, %s7, %s5
  // Predicated region
  $region2: #{lstm_net_forward.2} parent=0 // pred_check
    _
  $region3: #{lstm_net_forward.2} parent=0 // pred_check_branch
    %10 = sbr.rel (0) target = $region5
  $region4: #{lstm_net_forward.2} parent=0 // pred_region
    _
  $region5: #{lstm_net_forward.2} parent=0 // pred_fallthru
    _
  // Predicated region
  $region6: #{lstm_net_forward.2} parent=0 // pred_check
    _
  $region7: #{lstm_net_forward.2} parent=0 // pred_check_branch
    %12 = sbr.rel (0) target = $region9
  $region8: #{lstm_net_forward.2} parent=0 // pred_region
    _
  $region9: #{lstm_net_forward.2} parent=0 // pred_fallthru
    _
  // Predicated region
  $region10: #{lstm_net_forward.2} parent=0 // pred_check
    _
  $region11: #{lstm_net_forward.2} parent=0 // pred_check_branch
    %14 = sbr.rel (0) target = $region13
  $region12: #{lstm_net_forward.2} parent=0 // pred_region
    _
  $region13: #{lstm_net_forward.2} parent=0 // pred_fallthru
    _
  // Predicated region
  $region14: #{lstm_net_forward.2} parent=0 // pred_check
    _
  $region15: #{lstm_net_forward.2} parent=0 // pred_check_branch
    %16 = sbr.rel (0) target = $region17
  $region16: #{lstm_net_forward.2} parent=0 // pred_region
    _
  $region17: #{lstm_net_forward.2} parent=0 // pred_fallthru
    _
  %p18 = scmp.eq.s32.totalorder 0, 0
  // Predicated region
  $region18: #{lstm_net_forward.2} parent=0 // pred_check
    %p19 = pneg %p18
  $region19: #{lstm_net_forward.2} parent=0 // pred_check_branch
    %21 = sbr.rel (%p19) target = $region21
  $region20: #{lstm_net_forward.2} parent=0 // pred_region
    %vm22 = vcmask 523264
    %23 = vst.msk [vmem:[#allocation2] sm:$0xff] %vm22, 0.0
    %vm24 = vcmask 261120
    %25 = vst.msk [vmem:[#allocation3] sm:$0xff] %vm24, 0.0
    %26 = vst.msk [vmem:[#allocation4] sm:$0xff] %vm24, 0.0
  $region21: #{lstm_net_forward.2} parent=0 // pred_fallthru
    _
  %v27 = vld [vmem:[%s1] sm:$0xf]
  %v28 = vld [vmem:[%s1 + $0x4] sm:$0xf]
  %v29 = vld [vmem:[%s1 + $0x8] sm:$0xf]
  %v30 = vld [vmem:[%s1 + $0xc] sm:$0xf]
  %v31 = vld [vmem:[%s2] sm:$0xf]
  %v32 = vld [vmem:[%s2 + $0x4] sm:$0xf]
  %v33 = vld [vmem:[%s2 + $0x8] sm:$0xf]
  %v34 = vld [vmem:[%s2 + $0xc] sm:$0xf]
  %v35 = vld [vmem:[%s2 + $0x10] sm:$0xf]
  %v36 = vld [vmem:[%s2 + $0x14] sm:$0xf]
  %v37 = vld [vmem:[%s2 + $0x18] sm:$0xf]
  %v38 = vld [vmem:[%s2 + $0x1c] sm:$0xf]
  %v39 = vld [vmem:[%s3] sm:$0x1]
  %v41 = vperm.slane %v39, 0
  %v43 = vld [vmem:[#allocation2] sm:$0xff]
  %v44 = vpack.c.bf16 %v43, %v43
  %v45 = vld [vmem:[%s0] sm:$0xff]
  %v50 = vunpack.c.l.b16 %v27
  %v51 = vunpack.c.l.b16 %v28
  %v52 = vunpack.c.l.b16 %v29
  %v53 = vunpack.c.l.b16 %v30
  %v54 = vpack.c.b16 %v51, %v50
  %v55 = vpack.c.b16 %v53, %v52
  %vm58 = vcmask 261120
  %v60 = vsel %vm58, %v44, 0
  %62 = vmatpush.bf16.msra.mxu0 0
  %63 = vmatpush.bf16.msra.mxu0 0
  %64 = vmatpush.bf16.msra.mxu0 0
  %65 = vmatpush.bf16.msra.mxu0 0
  %66 = vmatpush.bf16.msra.mxu0 0
  %67 = vmatpush.bf16.msra.mxu0 0
  %68 = vmatpush.bf16.msra.mxu0 %v55
  %69 = vmatpush.bf16.msra.mxu0 %v54
  %70 = vmatmul.bf16.gmra.mxu0 %v60
  %v71 = vpop.f32.mrf.mxu0
  %v72 = vadd.f32 0.0, %v71
  %v73 = vpop.f32.mrf.mxu0
  %74 = vdwg.mxu0
  %v75 = vadd.f32 %v45, %v72
  %v76 = vld [vmem:[#allocation3] sm:$0xff]
  %v77 = vxor.u32 %v75, 2147483648
  %v78 = vmul.f32 %v77, 1.442695
  %v79 = vpow.pop %v78
  %v80 = vadd.f32 %v79, 1.0
  %v81 = vrcp.pop %v80
  %v82 = vmul.f32 %v80, %v81
  %v83 = vsub.f32 1.0, %v82
  %v84 = vmul.f32 %v81, %v83
  %v85 = vadd.f32 %v81, %v84
  %vm86 = vweird.f32 %v80
  %vm87 = vweird.f32 %v81
  %vm88 = vmor %vm86, %vm87
  %v89 = vsel %vm88, %v81, %v85
  %v90 = vand.u32 2147483647, %v80
  %vm91 = vcmp.eq.f32.partialorder %v90, 8.507059e+37
  %v92 = vand.u32 %v80, 2147483648
  %v93 = vor.u32 1.1754944e-38, %v92
  %v94 = vsel %vm91, %v93, %v89
  %v95 = vmul.f32 1.0, %v94
  %v96 = vtanh.pop %v75
  %98 = vrot.lane.b32.xlu0 %v76, 32
  %v99 = vpop.permute.xlu0 %98
  %v101 = vmul.f32 %v95, %v99
  %103 = vrot.lane.b32.xlu0 %v96, 64
  %v104 = vpop.permute.xlu0 %103
  %v106 = vmul.f32 %v95, %v104
  %108 = vrot.lane.b32.xlu0 %v106, 32
  %v109 = vpop.permute.xlu0 %108
  %v111 = vadd.f32 %v101, %v109
  %v112 = vtanh.pop %v111
  %114 = vrot.lane.b32.xlu0 %v112, 64
  %v115 = vpop.permute.xlu0 %114
  %v117 = vmul.f32 %v95, %v115
  %119 = vrot.lane.b32.xlu0 %v111, 96
  %v120 = vpop.permute.xlu0 %119
  %122 = vst.msk [vmem:[#allocation3] sm:$0xff] %vm58, %v120
  %124 = vrot.lane.b32.xlu0 %v117, 32
  %v125 = vpop.permute.xlu0 %124
  %127 = vst.msk [vmem:[#allocation2] sm:$0xff] %vm58, %v125
  %v128 = vld [vmem:[#allocation2] sm:$0xff]
  %v129 = vpack.c.bf16 %v128, %v128
  %v138 = vunpack.c.l.b16 %v31
  %v139 = vunpack.c.l.b16 %v32
  %v140 = vunpack.c.l.b16 %v33
  %v141 = vunpack.c.l.b16 %v34
  %v142 = vunpack.c.l.b16 %v35
  %v143 = vunpack.c.l.b16 %v36
  %v144 = vunpack.c.l.b16 %v37
  %v145 = vunpack.c.l.b16 %v38
  %v146 = vpack.c.b16 %v139, %v138
  %v147 = vpack.c.b16 %v141, %v140
  %v148 = vpack.c.b16 %v143, %v142
  %v149 = vpack.c.b16 %v145, %v144
  %vm154 = vcmask 523264
  %v156 = vsel %vm154, %v129, 0
  %158 = vmatpush.bf16.msra.mxu0 0
  %159 = vmatpush.bf16.msra.mxu0 0
  %160 = vmatpush.bf16.msra.mxu0 0
  %161 = vmatpush.bf16.msra.mxu0 0
  %162 = vmatpush.bf16.msra.mxu0 %v149
  %163 = vmatpush.bf16.msra.mxu0 %v148
  %164 = vmatpush.bf16.msra.mxu0 %v147
  %165 = vmatpush.bf16.msra.mxu0 %v146
  %166 = vmatmul.bf16.gmra.mxu0 %v156
  %v167 = vpop.f32.mrf.mxu0
  %v168 = vadd.f32 %v41, %v167
  %v169 = vpop.f32.mrf.mxu0
  %170 = vdwg.mxu0
  %v171 = vld [vmem:[#allocation4] sm:$0xff]
  %v172 = vxor.u32 %v168, 2147483648
  %v173 = vmul.f32 %v172, 1.442695
  %v174 = vpow.pop %v173
  %v175 = vadd.f32 %v174, 1.0
  %v176 = vrcp.pop %v175
  %v177 = vmul.f32 %v175, %v176
  %v178 = vsub.f32 1.0, %v177
  %v179 = vmul.f32 %v176, %v178
  %v180 = vadd.f32 %v176, %v179
  %vm181 = vweird.f32 %v175
  %vm182 = vweird.f32 %v176
  %vm183 = vmor %vm181, %vm182
  %v184 = vsel %vm183, %v176, %v180
  %v185 = vand.u32 2147483647, %v175
  %vm186 = vcmp.eq.f32.partialorder %v185, 8.507059e+37
  %v187 = vand.u32 %v175, 2147483648
  %v188 = vor.u32 1.1754944e-38, %v187
  %v189 = vsel %vm186, %v188, %v184
  %v190 = vmul.f32 1.0, %v189
  %v191 = vtanh.pop %v168
  %193 = vrot.lane.b32.xlu0 %v171, 32
  %v194 = vpop.permute.xlu0 %193
  %v196 = vmul.f32 %v190, %v194
  %198 = vrot.lane.b32.xlu0 %v191, 64
  %v199 = vpop.permute.xlu0 %198
  %v201 = vmul.f32 %v190, %v199
  %203 = vrot.lane.b32.xlu0 %v201, 32
  %v204 = vpop.permute.xlu0 %203
  %v206 = vadd.f32 %v196, %v204
  %v207 = vtanh.pop %v206
  %209 = vrot.lane.b32.xlu0 %v207, 64
  %v210 = vpop.permute.xlu0 %209
  %v212 = vmul.f32 %v190, %v210
  %214 = vrot.lane.b32.xlu0 %v206, 96
  %v215 = vpop.permute.xlu0 %214
  %217 = vst.msk [vmem:[#allocation4] sm:$0xff] %vm58, %v215
  %219 = vrot.lane.b32.xlu0 %v212, 64
  %v220 = vpop.permute.xlu0 %219
  %vm222 = vcmask 523520
  %223 = vst.msk [vmem:[#allocation2] sm:$0xff] %vm222, %v220
  %224 = vrot.lane.b32.xlu0 %v212, 32
  %v225 = vpop.permute.xlu0 %224
  %227 = vst.msk [vmem:[%s4] sm:$0xff] %vm58, %v225
  %v228 = vld [vmem:[#allocation2] sm:$0xff]
  %v229 = vpack.c.bf16 %v228, %v228
  %s230 = scalar_lea.vmem %s0, 8
  %v231 = vld [vmem:[%s230] sm:$0xff]
  %v233 = vsel %vm58, %v229, 0
  %235 = vmatpush.bf16.msra.mxu0 0
  %236 = vmatpush.bf16.msra.mxu0 0
  %237 = vmatpush.bf16.msra.mxu0 0
  %238 = vmatpush.bf16.msra.mxu0 0
  %239 = vmatpush.bf16.msra.mxu0 0
  %240 = vmatpush.bf16.msra.mxu0 0
  %241 = vmatpush.bf16.msra.mxu0 %v55
  %242 = vmatpush.bf16.msra.mxu0 %v54
  %243 = vmatmul.bf16.gmra.mxu0 %v233
  %v244 = vpop.f32.mrf.mxu0
  %v245 = vadd.f32 0.0, %v244
  %v246 = vpop.f32.mrf.mxu0
  %247 = vdwg.mxu0
  %v248 = vadd.f32 %v231, %v245
  %v249 = vld [vmem:[#allocation3] sm:$0xff]
  %v250 = vxor.u32 %v248, 2147483648
  %v251 = vmul.f32 %v250, 1.442695
  %v252 = vpow.pop %v251
  %v253 = vadd.f32 %v252, 1.0
  %v254 = vrcp.pop %v253
  %v255 = vmul.f32 %v253, %v254
  %v256 = vsub.f32 1.0, %v255
  %v257 = vmul.f32 %v254, %v256
  %v258 = vadd.f32 %v254, %v257
  %vm259 = vweird.f32 %v253
  %vm260 = vweird.f32 %v254
  %vm261 = vmor %vm259, %vm260
  %v262 = vsel %vm261, %v254, %v258
  %v263 = vand.u32 2147483647, %v253
  %vm264 = vcmp.eq.f32.partialorder %v263, 8.507059e+37
  %v265 = vand.u32 %v253, 2147483648
  %v266 = vor.u32 1.1754944e-38, %v265
  %v267 = vsel %vm264, %v266, %v262
  %v268 = vmul.f32 1.0, %v267
  %v269 = vtanh.pop %v248
  %271 = vrot.lane.b32.xlu0 %v249, 32
  %v272 = vpop.permute.xlu0 %271
  %v274 = vmul.f32 %v268, %v272
  %276 = vrot.lane.b32.xlu0 %v269, 64
  %v277 = vpop.permute.xlu0 %276
  %v279 = vmul.f32 %v268, %v277
  %281 = vrot.lane.b32.xlu0 %v279, 32
  %v282 = vpop.permute.xlu0 %281
  %v284 = vadd.f32 %v274, %v282
  %v285 = vtanh.pop %v284
  %287 = vrot.lane.b32.xlu0 %v285, 64
  %v288 = vpop.permute.xlu0 %287
  %v290 = vmul.f32 %v268, %v288
  %292 = vrot.lane.b32.xlu0 %v284, 96
  %v293 = vpop.permute.xlu0 %292
  %295 = vst.msk [vmem:[#allocation3] sm:$0xff] %vm58, %v293
  %297 = vrot.lane.b32.xlu0 %v290, 32
  %v298 = vpop.permute.xlu0 %297
  %300 = vst.msk [vmem:[#allocation2] sm:$0xff] %vm58, %v298
  %v301 = vld [vmem:[#allocation2] sm:$0xff]
  %v302 = vpack.c.bf16 %v301, %v301
  %v304 = vsel %vm154, %v302, 0
  %306 = vmatpush.bf16.msra.mxu0 0
  %307 = vmatpush.bf16.msra.mxu0 0
  %308 = vmatpush.bf16.msra.mxu0 0
  %309 = vmatpush.bf16.msra.mxu0 0
  %310 = vmatpush.bf16.msra.mxu0 %v149
  %311 = vmatpush.bf16.msra.mxu0 %v148
  %312 = vmatpush.bf16.msra.mxu0 %v147
  %313 = vmatpush.bf16.msra.mxu0 %v146
  %314 = vmatmul.bf16.gmra.mxu0 %v304
  %v315 = vpop.f32.mrf.mxu0
  %v316 = vadd.f32 %v41, %v315
  %v317 = vpop.f32.mrf.mxu0
  %318 = vdwg.mxu0
  %v319 = vld [vmem:[#allocation4] sm:$0xff]
  %v320 = vxor.u32 %v316, 2147483648
  %v321 = vmul.f32 %v320, 1.442695
  %v322 = vpow.pop %v321
  %v323 = vadd.f32 %v322, 1.0
  %v324 = vrcp.pop %v323
  %v325 = vmul.f32 %v323, %v324
  %v326 = vsub.f32 1.0, %v325
  %v327 = vmul.f32 %v324, %v326
  %v328 = vadd.f32 %v324, %v327
  %vm329 = vweird.f32 %v323
  %vm330 = vweird.f32 %v324
  %vm331 = vmor %vm329, %vm330
  %v332 = vsel %vm331, %v324, %v328
  %v333 = vand.u32 2147483647, %v323
  %vm334 = vcmp.eq.f32.partialorder %v333, 8.507059e+37
  %v335 = vand.u32 %v323, 2147483648
  %v336 = vor.u32 1.1754944e-38, %v335
  %v337 = vsel %vm334, %v336, %v332
  %v338 = vmul.f32 1.0, %v337
  %v339 = vtanh.pop %v316
  %341 = vrot.lane.b32.xlu0 %v319, 32
  %v342 = vpop.permute.xlu0 %341
  %v344 = vmul.f32 %v338, %v342
  %346 = vrot.lane.b32.xlu0 %v339, 64
  %v347 = vpop.permute.xlu0 %346
  %v349 = vmul.f32 %v338, %v347
  %351 = vrot.lane.b32.xlu0 %v349, 32
  %v352 = vpop.permute.xlu0 %351
  %v354 = vadd.f32 %v344, %v352
  %v355 = vtanh.pop %v354
  %357 = vrot.lane.b32.xlu0 %v355, 64
  %v358 = vpop.permute.xlu0 %357
  %v360 = vmul.f32 %v338, %v358
  %362 = vrot.lane.b32.xlu0 %v354, 96
  %v363 = vpop.permute.xlu0 %362
  %365 = vst.msk [vmem:[#allocation4] sm:$0xff] %vm58, %v363
  %367 = vrot.lane.b32.xlu0 %v360, 64
  %v368 = vpop.permute.xlu0 %367
  %370 = vst.msk [vmem:[#allocation2] sm:$0xff] %vm222, %v368
  %371 = vrot.lane.b32.xlu0 %v360, 32
  %v372 = vpop.permute.xlu0 %371
  %s374 = scalar_lea.vmem %s4, 8
  %375 = vst.msk [vmem:[%s374] sm:$0xff] %vm58, %v372
  %v376 = vld [vmem:[#allocation2] sm:$0xff]
  %v377 = vpack.c.bf16 %v376, %v376
  %s378 = scalar_lea.vmem %s0, 16
  %v379 = vld [vmem:[%s378] sm:$0xff]
  %v381 = vsel %vm58, %v377, 0
  %383 = vmatpush.bf16.msra.mxu0 0
  %384 = vmatpush.bf16.msra.mxu0 0
  %385 = vmatpush.bf16.msra.mxu0 0
  %386 = vmatpush.bf16.msra.mxu0 0
  %387 = vmatpush.bf16.msra.mxu0 0
  %388 = vmatpush.bf16.msra.mxu0 0
  %389 = vmatpush.bf16.msra.mxu0 %v55
  %390 = vmatpush.bf16.msra.mxu0 %v54
  %391 = vmatmul.bf16.gmra.mxu0 %v381
  %v392 = vpop.f32.mrf.mxu0
  %v393 = vadd.f32 0.0, %v392
  %v394 = vpop.f32.mrf.mxu0
  %395 = vdwg.mxu0
  %v396 = vadd.f32 %v379, %v393
  %v397 = vld [vmem:[#allocation3] sm:$0xff]
  %v398 = vxor.u32 %v396, 2147483648
  %v399 = vmul.f32 %v398, 1.442695
  %v400 = vpow.pop %v399
  %v401 = vadd.f32 %v400, 1.0
  %v402 = vrcp.pop %v401
  %v403 = vmul.f32 %v401, %v402
  %v404 = vsub.f32 1.0, %v403
  %v405 = vmul.f32 %v402, %v404
  %v406 = vadd.f32 %v402, %v405
  %vm407 = vweird.f32 %v401
  %vm408 = vweird.f32 %v402
  %vm409 = vmor %vm407, %vm408
  %v410 = vsel %vm409, %v402, %v406
  %v411 = vand.u32 2147483647, %v401
  %vm412 = vcmp.eq.f32.partialorder %v411, 8.507059e+37
  %v413 = vand.u32 %v401, 2147483648
  %v414 = vor.u32 1.1754944e-38, %v413
  %v415 = vsel %vm412, %v414, %v410
  %v416 = vmul.f32 1.0, %v415
  %v417 = vtanh.pop %v396
  %419 = vrot.lane.b32.xlu0 %v397, 32
  %v420 = vpop.permute.xlu0 %419
  %v422 = vmul.f32 %v416, %v420
  %424 = vrot.lane.b32.xlu0 %v417, 64
  %v425 = vpop.permute.xlu0 %424
  %v427 = vmul.f32 %v416, %v425
  %429 = vrot.lane.b32.xlu0 %v427, 32
  %v430 = vpop.permute.xlu0 %429
  %v432 = vadd.f32 %v422, %v430
  %v433 = vtanh.pop %v432
  %435 = vrot.lane.b32.xlu0 %v433, 64
  %v436 = vpop.permute.xlu0 %435
  %v438 = vmul.f32 %v416, %v436
  %440 = vrot.lane.b32.xlu0 %v432, 96
  %v441 = vpop.permute.xlu0 %440
  %443 = vst.msk [vmem:[#allocation3] sm:$0xff] %vm58, %v441
  %445 = vrot.lane.b32.xlu0 %v438, 32
  %v446 = vpop.permute.xlu0 %445
  %448 = vst.msk [vmem:[#allocation2] sm:$0xff] %vm58, %v446
  %v449 = vld [vmem:[#allocation2] sm:$0xff]
  %v450 = vpack.c.bf16 %v449, %v449
  %v452 = vsel %vm154, %v450, 0
  %454 = vmatpush.bf16.msra.mxu0 0
  %455 = vmatpush.bf16.msra.mxu0 0
  %456 = vmatpush.bf16.msra.mxu0 0
  %457 = vmatpush.bf16.msra.mxu0 0
  %458 = vmatpush.bf16.msra.mxu0 %v149
  %459 = vmatpush.bf16.msra.mxu0 %v148
  %460 = vmatpush.bf16.msra.mxu0 %v147
  %461 = vmatpush.bf16.msra.mxu0 %v146
  %462 = vmatmul.bf16.gmra.mxu0 %v452
  %v463 = vpop.f32.mrf.mxu0
  %v464 = vadd.f32 %v41, %v463
  %v465 = vpop.f32.mrf.mxu0
  %466 = vdwg.mxu0
  %v467 = vld [vmem:[#allocation4] sm:$0xff]
  %v468 = vxor.u32 %v464, 2147483648
  %v469 = vmul.f32 %v468, 1.442695
  %v470 = vpow.pop %v469
  %v471 = vadd.f32 %v470, 1.0
  %v472 = vrcp.pop %v471
  %v473 = vmul.f32 %v471, %v472
  %v474 = vsub.f32 1.0, %v473
  %v475 = vmul.f32 %v472, %v474
  %v476 = vadd.f32 %v472, %v475
  %vm477 = vweird.f32 %v471
  %vm478 = vweird.f32 %v472
  %vm479 = vmor %vm477, %vm478
  %v480 = vsel %vm479, %v472, %v476
  %v481 = vand.u32 2147483647, %v471
  %vm482 = vcmp.eq.f32.partialorder %v481, 8.507059e+37
  %v483 = vand.u32 %v471, 2147483648
  %v484 = vor.u32 1.1754944e-38, %v483
  %v485 = vsel %vm482, %v484, %v480
  %v486 = vmul.f32 1.0, %v485
  %v487 = vtanh.pop %v464
  %489 = vrot.lane.b32.xlu0 %v467, 32
  %v490 = vpop.permute.xlu0 %489
  %v492 = vmul.f32 %v486, %v490
  %494 = vrot.lane.b32.xlu0 %v487, 64
  %v495 = vpop.permute.xlu0 %494
  %v497 = vmul.f32 %v486, %v495
  %499 = vrot.lane.b32.xlu0 %v497, 32
  %v500 = vpop.permute.xlu0 %499
  %v502 = vadd.f32 %v492, %v500
  %v503 = vtanh.pop %v502
  %505 = vrot.lane.b32.xlu0 %v503, 64
  %v506 = vpop.permute.xlu0 %505
  %v508 = vmul.f32 %v486, %v506
  %510 = vrot.lane.b32.xlu0 %v502, 96
  %v511 = vpop.permute.xlu0 %510
  %513 = vst.msk [vmem:[#allocation4] sm:$0xff] %vm58, %v511
  %515 = vrot.lane.b32.xlu0 %v508, 64
  %v516 = vpop.permute.xlu0 %515
  %518 = vst.msk [vmem:[#allocation2] sm:$0xff] %vm222, %v516
  %519 = vrot.lane.b32.xlu0 %v508, 32
  %v520 = vpop.permute.xlu0 %519
  %s522 = scalar_lea.vmem %s4, 16
  %523 = vst.msk [vmem:[%s522] sm:$0xff] %vm58, %v520
  %v524 = vld [vmem:[#allocation2] sm:$0xff]
  %v525 = vpack.c.bf16 %v524, %v524
  %s526 = scalar_lea.vmem %s0, 24
  %v527 = vld [vmem:[%s526] sm:$0xff]
  %v529 = vsel %vm58, %v525, 0
  %531 = vmatpush.bf16.msra.mxu0 0
  %532 = vmatpush.bf16.msra.mxu0 0
  %533 = vmatpush.bf16.msra.mxu0 0
  %534 = vmatpush.bf16.msra.mxu0 0
  %535 = vmatpush.bf16.msra.mxu0 0
  %536 = vmatpush.bf16.msra.mxu0 0
  %537 = vmatpush.bf16.msra.mxu0 %v55
  %538 = vmatpush.bf16.msra.mxu0 %v54
  %539 = vmatmul.bf16.gmra.mxu0 %v529
  %v540 = vpop.f32.mrf.mxu0
  %v541 = vadd.f32 0.0, %v540
  %v542 = vpop.f32.mrf.mxu0
  %543 = vdwg.mxu0
  %v544 = vadd.f32 %v527, %v541
  %v545 = vld [vmem:[#allocation3] sm:$0xff]
  %v546 = vxor.u32 %v544, 2147483648
  %v547 = vmul.f32 %v546, 1.442695
  %v548 = vpow.pop %v547
  %v549 = vadd.f32 %v548, 1.0
  %v550 = vrcp.pop %v549
  %v551 = vmul.f32 %v549, %v550
  %v552 = vsub.f32 1.0, %v551
  %v553 = vmul.f32 %v550, %v552
  %v554 = vadd.f32 %v550, %v553
  %vm555 = vweird.f32 %v549
  %vm556 = vweird.f32 %v550
  %vm557 = vmor %vm555, %vm556
  %v558 = vsel %vm557, %v550, %v554
  %v559 = vand.u32 2147483647, %v549
  %vm560 = vcmp.eq.f32.partialorder %v559, 8.507059e+37
  %v561 = vand.u32 %v549, 2147483648
  %v562 = vor.u32 1.1754944e-38, %v561
  %v563 = vsel %vm560, %v562, %v558
  %v564 = vmul.f32 1.0, %v563
  %v565 = vtanh.pop %v544
  %567 = vrot.lane.b32.xlu0 %v545, 32
  %v568 = vpop.permute.xlu0 %567
  %v570 = vmul.f32 %v564, %v568
  %572 = vrot.lane.b32.xlu0 %v565, 64
  %v573 = vpop.permute.xlu0 %572
  %v575 = vmul.f32 %v564, %v573
  %577 = vrot.lane.b32.xlu0 %v575, 32
  %v578 = vpop.permute.xlu0 %577
  %v580 = vadd.f32 %v570, %v578
  %v581 = vtanh.pop %v580
  %583 = vrot.lane.b32.xlu0 %v581, 64
  %v584 = vpop.permute.xlu0 %583
  %v586 = vmul.f32 %v564, %v584
  %588 = vrot.lane.b32.xlu0 %v580, 96
  %v589 = vpop.permute.xlu0 %588
  %591 = vst.msk [vmem:[#allocation3] sm:$0xff] %vm58, %v589
  %593 = vrot.lane.b32.xlu0 %v586, 32
  %v594 = vpop.permute.xlu0 %593
  %596 = vst.msk [vmem:[#allocation2] sm:$0xff] %vm58, %v594
  %v597 = vld [vmem:[#allocation2] sm:$0xff]
  %v598 = vpack.c.bf16 %v597, %v597
  %v600 = vsel %vm154, %v598, 0
  %602 = vmatpush.bf16.msra.mxu0 0
  %603 = vmatpush.bf16.msra.mxu0 0
  %604 = vmatpush.bf16.msra.mxu0 0
  %605 = vmatpush.bf16.msra.mxu0 0
  %606 = vmatpush.bf16.msra.mxu0 %v149
  %607 = vmatpush.bf16.msra.mxu0 %v148
  %608 = vmatpush.bf16.msra.mxu0 %v147
  %609 = vmatpush.bf16.msra.mxu0 %v146
  %610 = vmatmul.bf16.gmra.mxu0 %v600
  %v611 = vpop.f32.mrf.mxu0
  %v612 = vadd.f32 %v41, %v611
  %v613 = vpop.f32.mrf.mxu0
  %614 = vdwg.mxu0
  %v615 = vld [vmem:[#allocation4] sm:$0xff]
  %v616 = vxor.u32 %v612, 2147483648
  %v617 = vmul.f32 %v616, 1.442695
  %v618 = vpow.pop %v617
  %v619 = vadd.f32 %v618, 1.0
  %v620 = vrcp.pop %v619
  %v621 = vmul.f32 %v619, %v620
  %v622 = vsub.f32 1.0, %v621
  %v623 = vmul.f32 %v620, %v622
  %v624 = vadd.f32 %v620, %v623
  %vm625 = vweird.f32 %v619
  %vm626 = vweird.f32 %v620
  %vm627 = vmor %vm625, %vm626
  %v628 = vsel %vm627, %v620, %v624
  %v629 = vand.u32 2147483647, %v619
  %vm630 = vcmp.eq.f32.partialorder %v629, 8.507059e+37
  %v631 = vand.u32 %v619, 2147483648
  %v632 = vor.u32 1.1754944e-38, %v631
  %v633 = vsel %vm630, %v632, %v628
  %v634 = vmul.f32 1.0, %v633
  %v635 = vtanh.pop %v612
  %637 = vrot.lane.b32.xlu0 %v615, 32
  %v638 = vpop.permute.xlu0 %637
  %v640 = vmul.f32 %v634, %v638
  %642 = vrot.lane.b32.xlu0 %v635, 64
  %v643 = vpop.permute.xlu0 %642
  %v645 = vmul.f32 %v634, %v643
  %647 = vrot.lane.b32.xlu0 %v645, 32
  %v648 = vpop.permute.xlu0 %647
  %v650 = vadd.f32 %v640, %v648
  %v651 = vtanh.pop %v650
  %653 = vrot.lane.b32.xlu0 %v651, 64
  %v654 = vpop.permute.xlu0 %653
  %v656 = vmul.f32 %v634, %v654
  %658 = vrot.lane.b32.xlu0 %v650, 96
  %v659 = vpop.permute.xlu0 %658
  %661 = vst.msk [vmem:[#allocation4] sm:$0xff] %vm58, %v659
  %663 = vrot.lane.b32.xlu0 %v656, 64
  %v664 = vpop.permute.xlu0 %663
  %666 = vst.msk [vmem:[#allocation2] sm:$0xff] %vm222, %v664
  %667 = vrot.lane.b32.xlu0 %v656, 32
  %v668 = vpop.permute.xlu0 %667
  %s670 = scalar_lea.vmem %s4, 24
  %671 = vst.msk [vmem:[%s670] sm:$0xff] %vm58, %v668
  %v672 = vld [vmem:[#allocation2] sm:$0xff]
  %v673 = vpack.c.bf16 %v672, %v672
  %s674 = scalar_lea.vmem %s0, 32
  %v675 = vld [vmem:[%s674] sm:$0xff]
  %v677 = vsel %vm58, %v673, 0
  %679 = vmatpush.bf16.msra.mxu0 0
  %680 = vmatpush.bf16.msra.mxu0 0
  %681 = vmatpush.bf16.msra.mxu0 0
  %682 = vmatpush.bf16.msra.mxu0 0
  %683 = vmatpush.bf16.msra.mxu0 0
  %684 = vmatpush.bf16.msra.mxu0 0
  %685 = vmatpush.bf16.msra.mxu0 %v55
  %686 = vmatpush.bf16.msra.mxu0 %v54
  %687 = vmatmul.bf16.gmra.mxu0 %v677
  %v688 = vpop.f32.mrf.mxu0
  %v689 = vadd.f32 0.0, %v688
  %v690 = vpop.f32.mrf.mxu0
  %691 = vdwg.mxu0
  %v692 = vadd.f32 %v675, %v689
  %v693 = vld [vmem:[#allocation3] sm:$0xff]
  %v694 = vxor.u32 %v692, 2147483648
  %v695 = vmul.f32 %v694, 1.442695
  %v696 = vpow.pop %v695
  %v697 = vadd.f32 %v696, 1.0
  %v698 = vrcp.pop %v697
  %v699 = vmul.f32 %v697, %v698
  %v700 = vsub.f32 1.0, %v699
  %v701 = vmul.f32 %v698, %v700
  %v702 = vadd.f32 %v698, %v701
  %vm703 = vweird.f32 %v697
  %vm704 = vweird.f32 %v698
  %vm705 = vmor %vm703, %vm704
  %v706 = vsel %vm705, %v698, %v702
  %v707 = vand.u32 2147483647, %v697
  %vm708 = vcmp.eq.f32.partialorder %v707, 8.507059e+37
  %v709 = vand.u32 %v697, 2147483648
  %v710 = vor.u32 1.1754944e-38, %v709
  %v711 = vsel %vm708, %v710, %v706
  %v712 = vmul.f32 1.0, %v711
  %v713 = vtanh.pop %v692
  %715 = vrot.lane.b32.xlu0 %v693, 32
  %v716 = vpop.permute.xlu0 %715
  %v718 = vmul.f32 %v712, %v716
  %720 = vrot.lane.b32.xlu0 %v713, 64
  %v721 = vpop.permute.xlu0 %720
  %v723 = vmul.f32 %v712, %v721
  %725 = vrot.lane.b32.xlu0 %v723, 32
  %v726 = vpop.permute.xlu0 %725
  %v728 = vadd.f32 %v718, %v726
  %v729 = vtanh.pop %v728
  %731 = vrot.lane.b32.xlu0 %v729, 64
  %v732 = vpop.permute.xlu0 %731
  %v734 = vmul.f32 %v712, %v732
  %736 = vrot.lane.b32.xlu0 %v728, 96
  %v737 = vpop.permute.xlu0 %736
  %739 = vst.msk [vmem:[#allocation3] sm:$0xff] %vm58, %v737
  %741 = vrot.lane.b32.xlu0 %v734, 32
  %v742 = vpop.permute.xlu0 %741
  %744 = vst.msk [vmem:[#allocation2] sm:$0xff] %vm58, %v742
  %v745 = vld [vmem:[#allocation2] sm:$0xff]
  %v746 = vpack.c.bf16 %v745, %v745
  %v748 = vsel %vm154, %v746, 0
  %750 = vmatpush.bf16.msra.mxu0 0
  %751 = vmatpush.bf16.msra.mxu0 0
  %752 = vmatpush.bf16.msra.mxu0 0
  %753 = vmatpush.bf16.msra.mxu0 0
  %754 = vmatpush.bf16.msra.mxu0 %v149
  %755 = vmatpush.bf16.msra.mxu0 %v148
  %756 = vmatpush.bf16.msra.mxu0 %v147
  %757 = vmatpush.bf16.msra.mxu0 %v146
  %758 = vmatmul.bf16.gmra.mxu0 %v748
  %v759 = vpop.f32.mrf.mxu0
  %v760 = vadd.f32 %v41, %v759
  %v761 = vpop.f32.mrf.mxu0
  %762 = vdwg.mxu0
  %v763 = vld [vmem:[#allocation4] sm:$0xff]
  %v764 = vxor.u32 %v760, 2147483648
  %v765 = vmul.f32 %v764, 1.442695
  %v766 = vpow.pop %v765
  %v767 = vadd.f32 %v766, 1.0
  %v768 = vrcp.pop %v767
  %v769 = vmul.f32 %v767, %v768
  %v770 = vsub.f32 1.0, %v769
  %v771 = vmul.f32 %v768, %v770
  %v772 = vadd.f32 %v768, %v771
  %vm773 = vweird.f32 %v767
  %vm774 = vweird.f32 %v768
  %vm775 = vmor %vm773, %vm774
  %v776 = vsel %vm775, %v768, %v772
  %v777 = vand.u32 2147483647, %v767
  %vm778 = vcmp.eq.f32.partialorder %v777, 8.507059e+37
  %v779 = vand.u32 %v767, 2147483648
  %v780 = vor.u32 1.1754944e-38, %v779
  %v781 = vsel %vm778, %v780, %v776
  %v782 = vmul.f32 1.0, %v781
  %v783 = vtanh.pop %v760
  %785 = vrot.lane.b32.xlu0 %v763, 32
  %v786 = vpop.permute.xlu0 %785
  %v788 = vmul.f32 %v782, %v786
  %790 = vrot.lane.b32.xlu0 %v783, 64
  %v791 = vpop.permute.xlu0 %790
  %v793 = vmul.f32 %v782, %v791
  %795 = vrot.lane.b32.xlu0 %v793, 32
  %v796 = vpop.permute.xlu0 %795
  %v798 = vadd.f32 %v788, %v796
  %v799 = vtanh.pop %v798
  %801 = vrot.lane.b32.xlu0 %v799, 64
  %v802 = vpop.permute.xlu0 %801
  %v804 = vmul.f32 %v782, %v802
  %806 = vrot.lane.b32.xlu0 %v798, 96
  %v807 = vpop.permute.xlu0 %806
  %809 = vst.msk [vmem:[#allocation4] sm:$0xff] %vm58, %v807
  %811 = vrot.lane.b32.xlu0 %v804, 64
  %v812 = vpop.permute.xlu0 %811
  %814 = vst.msk [vmem:[#allocation2] sm:$0xff] %vm222, %v812
  %815 = vrot.lane.b32.xlu0 %v804, 32
  %v816 = vpop.permute.xlu0 %815
  %s818 = scalar_lea.vmem %s4, 32
  %819 = vst.msk [vmem:[%s818] sm:$0xff] %vm58, %v816
  %v820 = vld [vmem:[#allocation2] sm:$0xff]
  %v821 = vpack.c.bf16 %v820, %v820
  %s822 = scalar_lea.vmem %s0, 40
  %v823 = vld [vmem:[%s822] sm:$0xff]
  %v825 = vsel %vm58, %v821, 0
  %827 = vmatpush.bf16.msra.mxu0 0
  %828 = vmatpush.bf16.msra.mxu0 0
  %829 = vmatpush.bf16.msra.mxu0 0
  %830 = vmatpush.bf16.msra.mxu0 0
  %831 = vmatpush.bf16.msra.mxu0 0
  %832 = vmatpush.bf16.msra.mxu0 0
  %833 = vmatpush.bf16.msra.mxu0 %v55
  %834 = vmatpush.bf16.msra.mxu0 %v54
  %835 = vmatmul.bf16.gmra.mxu0 %v825
  %v836 = vpop.f32.mrf.mxu0
  %v837 = vadd.f32 0.0, %v836
  %v838 = vpop.f32.mrf.mxu0
  %839 = vdwg.mxu0
  %v840 = vadd.f32 %v823, %v837
  %v841 = vld [vmem:[#allocation3] sm:$0xff]
  %v842 = vxor.u32 %v840, 2147483648
  %v843 = vmul.f32 %v842, 1.442695
  %v844 = vpow.pop %v843
  %v845 = vadd.f32 %v844, 1.0
  %v846 = vrcp.pop %v845
  %v847 = vmul.f32 %v845, %v846
  %v848 = vsub.f32 1.0, %v847
  %v849 = vmul.f32 %v846, %v848
  %v850 = vadd.f32 %v846, %v849
  %vm851 = vweird.f32 %v845
  %vm852 = vweird.f32 %v846
  %vm853 = vmor %vm851, %vm852
  %v854 = vsel %vm853, %v846, %v850
  %v855 = vand.u32 2147483647, %v845
  %vm856 = vcmp.eq.f32.partialorder %v855, 8.507059e+37
  %v857 = vand.u32 %v845, 2147483648
  %v858 = vor.u32 1.1754944e-38, %v857
  %v859 = vsel %vm856, %v858, %v854
  %v860 = vmul.f32 1.0, %v859
  %v861 = vtanh.pop %v840
  %863 = vrot.lane.b32.xlu0 %v841, 32
  %v864 = vpop.permute.xlu0 %863
  %v866 = vmul.f32 %v860, %v864
  %868 = vrot.lane.b32.xlu0 %v861, 64
  %v869 = vpop.permute.xlu0 %868
  %v871 = vmul.f32 %v860, %v869
  %873 = vrot.lane.b32.xlu0 %v871, 32
  %v874 = vpop.permute.xlu0 %873
  %v876 = vadd.f32 %v866, %v874
  %v877 = vtanh.pop %v876
  %879 = vrot.lane.b32.xlu0 %v877, 64
  %v880 = vpop.permute.xlu0 %879
  %v882 = vmul.f32 %v860, %v880
  %884 = vrot.lane.b32.xlu0 %v876, 96
  %v885 = vpop.permute.xlu0 %884
  %887 = vst.msk [vmem:[#allocation3] sm:$0xff] %vm58, %v885
  %889 = vrot.lane.b32.xlu0 %v882, 32
  %v890 = vpop.permute.xlu0 %889
  %892 = vst.msk [vmem:[#allocation2] sm:$0xff] %vm58, %v890
  %v893 = vld [vmem:[#allocation2] sm:$0xff]
  %v894 = vpack.c.bf16 %v893, %v893
  %v896 = vsel %vm154, %v894, 0
  %898 = vmatpush.bf16.msra.mxu0 0
  %899 = vmatpush.bf16.msra.mxu0 0
  %900 = vmatpush.bf16.msra.mxu0 0
  %901 = vmatpush.bf16.msra.mxu0 0
  %902 = vmatpush.bf16.msra.mxu0 %v149
  %903 = vmatpush.bf16.msra.mxu0 %v148
  %904 = vmatpush.bf16.msra.mxu0 %v147
  %905 = vmatpush.bf16.msra.mxu0 %v146
  %906 = vmatmul.bf16.gmra.mxu0 %v896
  %v907 = vpop.f32.mrf.mxu0
  %v908 = vadd.f32 %v41, %v907
  %v909 = vpop.f32.mrf.mxu0
  %910 = vdwg.mxu0
  %v911 = vld [vmem:[#allocation4] sm:$0xff]
  %v912 = vxor.u32 %v908, 2147483648
  %v913 = vmul.f32 %v912, 1.442695
  %v914 = vpow.pop %v913
  %v915 = vadd.f32 %v914, 1.0
  %v916 = vrcp.pop %v915
  %v917 = vmul.f32 %v915, %v916
  %v918 = vsub.f32 1.0, %v917
  %v919 = vmul.f32 %v916, %v918
  %v920 = vadd.f32 %v916, %v919
  %vm921 = vweird.f32 %v915
  %vm922 = vweird.f32 %v916
  %vm923 = vmor %vm921, %vm922
  %v924 = vsel %vm923, %v916, %v920
  %v925 = vand.u32 2147483647, %v915
  %vm926 = vcmp.eq.f32.partialorder %v925, 8.507059e+37
  %v927 = vand.u32 %v915, 2147483648
  %v928 = vor.u32 1.1754944e-38, %v927
  %v929 = vsel %vm926, %v928, %v924
  %v930 = vmul.f32 1.0, %v929
  %v931 = vtanh.pop %v908
  %933 = vrot.lane.b32.xlu0 %v911, 32
  %v934 = vpop.permute.xlu0 %933
  %v936 = vmul.f32 %v930, %v934
  %938 = vrot.lane.b32.xlu0 %v931, 64
  %v939 = vpop.permute.xlu0 %938
  %v941 = vmul.f32 %v930, %v939
  %943 = vrot.lane.b32.xlu0 %v941, 32
  %v944 = vpop.permute.xlu0 %943
  %v946 = vadd.f32 %v936, %v944
  %v947 = vtanh.pop %v946
  %949 = vrot.lane.b32.xlu0 %v947, 64
  %v950 = vpop.permute.xlu0 %949
  %v952 = vmul.f32 %v930, %v950
  %954 = vrot.lane.b32.xlu0 %v946, 96
  %v955 = vpop.permute.xlu0 %954
  %957 = vst.msk [vmem:[#allocation4] sm:$0xff] %vm58, %v955
  %959 = vrot.lane.b32.xlu0 %v952, 64
  %v960 = vpop.permute.xlu0 %959
  %962 = vst.msk [vmem:[#allocation2] sm:$0xff] %vm222, %v960
  %963 = vrot.lane.b32.xlu0 %v952, 32
  %v964 = vpop.permute.xlu0 %963
  %s966 = scalar_lea.vmem %s4, 40
  %967 = vst.msk [vmem:[%s966] sm:$0xff] %vm58, %v964
  %v968 = vld [vmem:[#allocation2] sm:$0xff]
  %v969 = vpack.c.bf16 %v968, %v968
  %s970 = scalar_lea.vmem %s0, 48
  %v971 = vld [vmem:[%s970] sm:$0xff]
  %v973 = vsel %vm58, %v969, 0
  %975 = vmatpush.bf16.msra.mxu0 0
  %976 = vmatpush.bf16.msra.mxu0 0
  %977 = vmatpush.bf16.msra.mxu0 0
  %978 = vmatpush.bf16.msra.mxu0 0
  %979 = vmatpush.bf16.msra.mxu0 0
  %980 = vmatpush.bf16.msra.mxu0 0
  %981 = vmatpush.bf16.msra.mxu0 %v55
  %982 = vmatpush.bf16.msra.mxu0 %v54
  %983 = vmatmul.bf16.gmra.mxu0 %v973
  %v984 = vpop.f32.mrf.mxu0
  %v985 = vadd.f32 0.0, %v984
  %v986 = vpop.f32.mrf.mxu0
  %987 = vdwg.mxu0
  %v988 = vadd.f32 %v971, %v985
  %v989 = vld [vmem:[#allocation3] sm:$0xff]
  %v990 = vxor.u32 %v988, 2147483648
  %v991 = vmul.f32 %v990, 1.442695
  %v992 = vpow.pop %v991
  %v993 = vadd.f32 %v992, 1.0
  %v994 = vrcp.pop %v993
  %v995 = vmul.f32 %v993, %v994
  %v996 = vsub.f32 1.0, %v995
  %v997 = vmul.f32 %v994, %v996
  %v998 = vadd.f32 %v994, %v997
  %vm999 = vweird.f32 %v993
  %vm1000 = vweird.f32 %v994
  %vm1001 = vmor %vm999, %vm1000
  %v1002 = vsel %vm1001, %v994, %v998
  %v1003 = vand.u32 2147483647, %v993
  %vm1004 = vcmp.eq.f32.partialorder %v1003, 8.507059e+37
  %v1005 = vand.u32 %v993, 2147483648
  %v1006 = vor.u32 1.1754944e-38, %v1005
  %v1007 = vsel %vm1004, %v1006, %v1002
  %v1008 = vmul.f32 1.0, %v1007
  %v1009 = vtanh.pop %v988
  %1011 = vrot.lane.b32.xlu0 %v989, 32
  %v1012 = vpop.permute.xlu0 %1011
  %v1014 = vmul.f32 %v1008, %v1012
  %1016 = vrot.lane.b32.xlu0 %v1009, 64
  %v1017 = vpop.permute.xlu0 %1016
  %v1019 = vmul.f32 %v1008, %v1017
  %1021 = vrot.lane.b32.xlu0 %v1019, 32
  %v1022 = vpop.permute.xlu0 %1021
  %v1024 = vadd.f32 %v1014, %v1022
  %v1025 = vtanh.pop %v1024
  %1027 = vrot.lane.b32.xlu0 %v1025, 64
  %v1028 = vpop.permute.xlu0 %1027
  %v1030 = vmul.f32 %v1008, %v1028
  %1032 = vrot.lane.b32.xlu0 %v1024, 96
  %v1033 = vpop.permute.xlu0 %1032
  %1035 = vst.msk [vmem:[#allocation3] sm:$0xff] %vm58, %v1033
  %1037 = vrot.lane.b32.xlu0 %v1030, 32
  %v1038 = vpop.permute.xlu0 %1037
  %1040 = vst.msk [vmem:[#allocation2] sm:$0xff] %vm58, %v1038
  %v1041 = vld [vmem:[#allocation2] sm:$0xff]
  %v1042 = vpack.c.bf16 %v1041, %v1041
  %v1044 = vsel %vm154, %v1042, 0
  %1046 = vmatpush.bf16.msra.mxu0 0
  %1047 = vmatpush.bf16.msra.mxu0 0
  %1048 = vmatpush.bf16.msra.mxu0 0
  %1049 = vmatpush.bf16.msra.mxu0 0
  %1050 = vmatpush.bf16.msra.mxu0 %v149
  %1051 = vmatpush.bf16.msra.mxu0 %v148
  %1052 = vmatpush.bf16.msra.mxu0 %v147
  %1053 = vmatpush.bf16.msra.mxu0 %v146
  %1054 = vmatmul.bf16.gmra.mxu0 %v1044
  %v1055 = vpop.f32.mrf.mxu0
  %v1056 = vadd.f32 %v41, %v1055
  %v1057 = vpop.f32.mrf.mxu0
  %1058 = vdwg.mxu0
  %v1059 = vld [vmem:[#allocation4] sm:$0xff]
  %v1060 = vxor.u32 %v1056, 2147483648
  %v1061 = vmul.f32 %v1060, 1.442695
  %v1062 = vpow.pop %v1061
  %v1063 = vadd.f32 %v1062, 1.0
  %v1064 = vrcp.pop %v1063
  %v1065 = vmul.f32 %v1063, %v1064
  %v1066 = vsub.f32 1.0, %v1065
  %v1067 = vmul.f32 %v1064, %v1066
  %v1068 = vadd.f32 %v1064, %v1067
  %vm1069 = vweird.f32 %v1063
  %vm1070 = vweird.f32 %v1064
  %vm1071 = vmor %vm1069, %vm1070
  %v1072 = vsel %vm1071, %v1064, %v1068
  %v1073 = vand.u32 2147483647, %v1063
  %vm1074 = vcmp.eq.f32.partialorder %v1073, 8.507059e+37
  %v1075 = vand.u32 %v1063, 2147483648
  %v1076 = vor.u32 1.1754944e-38, %v1075
  %v1077 = vsel %vm1074, %v1076, %v1072
  %v1078 = vmul.f32 1.0, %v1077
  %v1079 = vtanh.pop %v1056
  %1081 = vrot.lane.b32.xlu0 %v1059, 32
  %v1082 = vpop.permute.xlu0 %1081
  %v1084 = vmul.f32 %v1078, %v1082
  %1086 = vrot.lane.b32.xlu0 %v1079, 64
  %v1087 = vpop.permute.xlu0 %1086
  %v1089 = vmul.f32 %v1078, %v1087
  %1091 = vrot.lane.b32.xlu0 %v1089, 32
  %v1092 = vpop.permute.xlu0 %1091
  %v1094 = vadd.f32 %v1084, %v1092
  %v1095 = vtanh.pop %v1094
  %1097 = vrot.lane.b32.xlu0 %v1095, 64
  %v1098 = vpop.permute.xlu0 %1097
  %v1100 = vmul.f32 %v1078, %v1098
  %1102 = vrot.lane.b32.xlu0 %v1094, 96
  %v1103 = vpop.permute.xlu0 %1102
  %1105 = vst.msk [vmem:[#allocation4] sm:$0xff] %vm58, %v1103
  %1107 = vrot.lane.b32.xlu0 %v1100, 64
  %v1108 = vpop.permute.xlu0 %1107
  %1110 = vst.msk [vmem:[#allocation2] sm:$0xff] %vm222, %v1108
  %1111 = vrot.lane.b32.xlu0 %v1100, 32
  %v1112 = vpop.permute.xlu0 %1111
  %s1114 = scalar_lea.vmem %s4, 48
  %1115 = vst.msk [vmem:[%s1114] sm:$0xff] %vm58, %v1112
  %v1116 = vld [vmem:[#allocation2] sm:$0xff]
  %v1117 = vpack.c.bf16 %v1116, %v1116
  %s1118 = scalar_lea.vmem %s0, 56
  %v1119 = vld [vmem:[%s1118] sm:$0xff]
  %v1121 = vsel %vm58, %v1117, 0
  %1123 = vmatpush.bf16.msra.mxu0 0
  %1124 = vmatpush.bf16.msra.mxu0 0
  %1125 = vmatpush.bf16.msra.mxu0 0
  %1126 = vmatpush.bf16.msra.mxu0 0
  %1127 = vmatpush.bf16.msra.mxu0 0
  %1128 = vmatpush.bf16.msra.mxu0 0
  %1129 = vmatpush.bf16.msra.mxu0 %v55
  %1130 = vmatpush.bf16.msra.mxu0 %v54
  %1131 = vmatmul.bf16.gmra.mxu0 %v1121
  %v1132 = vpop.f32.mrf.mxu0
  %v1133 = vadd.f32 0.0, %v1132
  %v1134 = vpop.f32.mrf.mxu0
  %1135 = vdwg.mxu0
  %v1136 = vadd.f32 %v1119, %v1133
  %v1137 = vld [vmem:[#allocation3] sm:$0xff]
  %v1138 = vxor.u32 %v1136, 2147483648
  %v1139 = vmul.f32 %v1138, 1.442695
  %v1140 = vpow.pop %v1139
  %v1141 = vadd.f32 %v1140, 1.0
  %v1142 = vrcp.pop %v1141
  %v1143 = vmul.f32 %v1141, %v1142
  %v1144 = vsub.f32 1.0, %v1143
  %v1145 = vmul.f32 %v1142, %v1144
  %v1146 = vadd.f32 %v1142, %v1145
  %vm1147 = vweird.f32 %v1141
  %vm1148 = vweird.f32 %v1142
  %vm1149 = vmor %vm1147, %vm1148
  %v1150 = vsel %vm1149, %v1142, %v1146
  %v1151 = vand.u32 2147483647, %v1141
  %vm1152 = vcmp.eq.f32.partialorder %v1151, 8.507059e+37
  %v1153 = vand.u32 %v1141, 2147483648
  %v1154 = vor.u32 1.1754944e-38, %v1153
  %v1155 = vsel %vm1152, %v1154, %v1150
  %v1156 = vmul.f32 1.0, %v1155
  %v1157 = vtanh.pop %v1136
  %1159 = vrot.lane.b32.xlu0 %v1137, 32
  %v1160 = vpop.permute.xlu0 %1159
  %v1162 = vmul.f32 %v1156, %v1160
  %1164 = vrot.lane.b32.xlu0 %v1157, 64
  %v1165 = vpop.permute.xlu0 %1164
  %v1167 = vmul.f32 %v1156, %v1165
  %1169 = vrot.lane.b32.xlu0 %v1167, 32
  %v1170 = vpop.permute.xlu0 %1169
  %v1172 = vadd.f32 %v1162, %v1170
  %v1173 = vtanh.pop %v1172
  %1175 = vrot.lane.b32.xlu0 %v1173, 64
  %v1176 = vpop.permute.xlu0 %1175
  %v1178 = vmul.f32 %v1156, %v1176
  %1180 = vrot.lane.b32.xlu0 %v1172, 96
  %v1181 = vpop.permute.xlu0 %1180
  %1183 = vst.msk [vmem:[#allocation3] sm:$0xff] %vm58, %v1181
  %1185 = vrot.lane.b32.xlu0 %v1178, 32
  %v1186 = vpop.permute.xlu0 %1185
  %1188 = vst.msk [vmem:[#allocation2] sm:$0xff] %vm58, %v1186
  %v1189 = vld [vmem:[#allocation2] sm:$0xff]
  %v1190 = vpack.c.bf16 %v1189, %v1189
  %v1192 = vsel %vm154, %v1190, 0
  %1194 = vmatpush.bf16.msra.mxu0 0
  %1195 = vmatpush.bf16.msra.mxu0 0
  %1196 = vmatpush.bf16.msra.mxu0 0
  %1197 = vmatpush.bf16.msra.mxu0 0
  %1198 = vmatpush.bf16.msra.mxu0 %v149
  %1199 = vmatpush.bf16.msra.mxu0 %v148
  %1200 = vmatpush.bf16.msra.mxu0 %v147
  %1201 = vmatpush.bf16.msra.mxu0 %v146
  %1202 = vmatmul.bf16.gmra.mxu0 %v1192
  %v1203 = vpop.f32.mrf.mxu0
  %v1204 = vadd.f32 %v41, %v1203
  %v1205 = vpop.f32.mrf.mxu0
  %1206 = vdwg.mxu0
  %v1207 = vld [vmem:[#allocation4] sm:$0xff]
  %v1208 = vxor.u32 %v1204, 2147483648
  %v1209 = vmul.f32 %v1208, 1.442695
  %v1210 = vpow.pop %v1209
  %v1211 = vadd.f32 %v1210, 1.0
  %v1212 = vrcp.pop %v1211
  %v1213 = vmul.f32 %v1211, %v1212
  %v1214 = vsub.f32 1.0, %v1213
  %v1215 = vmul.f32 %v1212, %v1214
  %v1216 = vadd.f32 %v1212, %v1215
  %vm1217 = vweird.f32 %v1211
  %vm1218 = vweird.f32 %v1212
  %vm1219 = vmor %vm1217, %vm1218
  %v1220 = vsel %vm1219, %v1212, %v1216
  %v1221 = vand.u32 2147483647, %v1211
  %vm1222 = vcmp.eq.f32.partialorder %v1221, 8.507059e+37
  %v1223 = vand.u32 %v1211, 2147483648
  %v1224 = vor.u32 1.1754944e-38, %v1223
  %v1225 = vsel %vm1222, %v1224, %v1220
  %v1226 = vmul.f32 1.0, %v1225
  %v1227 = vtanh.pop %v1204
  %1229 = vrot.lane.b32.xlu0 %v1207, 32
  %v1230 = vpop.permute.xlu0 %1229
  %v1232 = vmul.f32 %v1226, %v1230
  %1234 = vrot.lane.b32.xlu0 %v1227, 64
  %v1235 = vpop.permute.xlu0 %1234
  %v1237 = vmul.f32 %v1226, %v1235
  %1239 = vrot.lane.b32.xlu0 %v1237, 32
  %v1240 = vpop.permute.xlu0 %1239
  %v1242 = vadd.f32 %v1232, %v1240
  %v1243 = vtanh.pop %v1242
  %1245 = vrot.lane.b32.xlu0 %v1243, 64
  %v1246 = vpop.permute.xlu0 %1245
  %v1248 = vmul.f32 %v1226, %v1246
  %1250 = vrot.lane.b32.xlu0 %v1242, 96
  %v1251 = vpop.permute.xlu0 %1250
  %1253 = vst.msk [vmem:[#allocation4] sm:$0xff] %vm58, %v1251
  %1255 = vrot.lane.b32.xlu0 %v1248, 64
  %v1256 = vpop.permute.xlu0 %1255
  %1258 = vst.msk [vmem:[#allocation2] sm:$0xff] %vm222, %v1256
  %1259 = vrot.lane.b32.xlu0 %v1248, 32
  %v1260 = vpop.permute.xlu0 %1259
  %s1262 = scalar_lea.vmem %s4, 56
  %1263 = vst.msk [vmem:[%s1262] sm:$0xff] %vm58, %v1260
  // Predicated region
  $region22: #{lstm_net_forward.2} parent=0 // pred_check
    _
  $region23: #{lstm_net_forward.2} parent=0 // pred_check_branch
    %1265 = sbr.rel (0) target = $region25
  $region24: #{lstm_net_forward.2} parent=0 // pred_region
    _
  $region25: #{lstm_net_forward.2} parent=0 // pred_fallthru
    _
  // Predicated region
  $region26: #{lstm_net_forward.2} parent=0 // pred_check
    _
  $region27: #{lstm_net_forward.2} parent=0 // pred_check_branch
    %1267 = sbr.rel (0) target = $region29
  $region28: #{lstm_net_forward.2} parent=0 // pred_region
    _
  $region29: #{lstm_net_forward.2} parent=0 // pred_fallthru
    _

</llo_original>
